<compile_context>
chip_gen: v7x
topology: tpu7x:2x2x1
jax: 0.10.0
libtpu: 0.0.40
codegen_flags: <defaults>
</compile_context>

<pallas_src>
import jax
import jax.numpy as jnp
from jax.experimental import pallas as pl
from jax.experimental.pallas import tpu as pltpu


def _round_up(x, m):
    return ((x + m - 1) // m) * m


# ----------------------------------------------------------------------------
# Fused kernel factory
# ----------------------------------------------------------------------------
def _make_fused_kernel(L, T, Bp, H, S, C, O, P):
    SS, SC = S * S, S * C
    G4 = 4 * H
    RAW = SS + SC + S + O
    PAD = P - RAW
    TBp = T * Bp
    f32 = jnp.float32
    bf16 = jnp.bfloat16

    def kernel(x_ref, w0x_ref, wcomb_ref, bcomb_ref, wab_ref, bab_ref,
               ct_ref, sel_ref, hc0_ref, s0_ref, slab_ref, hcT_ref):
        # ------------------------------------------------------------------
        # Off-chain MXU pass: layer-0 input projection + tiled control signal
        #   x @ [W_ih0 | Eu]  ->  [gx0 | u_tiled]
        # ------------------------------------------------------------------
        x_b = x_ref[...].astype(bf16)                              # (TBp, C)
        proj0 = jnp.dot(x_b, w0x_ref[...],
                        preferred_element_type=f32)                # (TBp, 4H+SC)
        gx0 = proj0[:, :G4]                                        # (TBp, 4H)
        u_tiled = proj0[:, G4:]                                    # (TBp, S*C)

        wcomb = wcomb_ref[...]                                     # (L*H, L*4H) bf16
        bcomb = bcomb_ref[...]                                     # (1, L*4H)   f32

        hc0 = hc0_ref[...]                                         # (Bp, L*2H)
        hs = [hc0[:, 2 * H * l:2 * H * l + H] for l in range(L)]
        cs = [hc0[:, 2 * H * l + H:2 * H * (l + 1)] for l in range(L)]

        y_last = [None] * T                                        # last-layer outputs

        # ------------------------------------------------------------------
        # Wavefront over the LSTM layers: step k runs layer l at time t=k-l.
        # The combined matmul's layer-l gate block already contains
        #   y_{l-1}[t] @ W_ih[l] + h_l[t-1] @ W_hh[l]
        # because h_cat is snapshotted at the start of the step.
        # Gate column order is [i | f | o | g].
        # TODO(synk): nn.LSTM inter-layer dropout is training-only; inference
        # semantics (no dropout) are implemented here.
        # ------------------------------------------------------------------
        for k in range(T + L - 1):                                 # static unroll
            h_cat = jnp.concatenate(hs, axis=1).astype(bf16)       # (Bp, L*H)
            g_all = jnp.dot(h_cat, wcomb,
                            preferred_element_type=f32) + bcomb    # (Bp, L*4H)
            for l in range(L):
                t = k - l
                if t < 0 or t >= T:
                    continue
                g = g_all[:, l * G4:(l + 1) * G4]                  # (Bp, 4H)
                if l == 0:
                    g = g + gx0[t * Bp:(t + 1) * Bp, :]
                sg = jax.nn.sigmoid(g[:, :3 * H])                  # f32 gate math
                i_g = sg[:, 0:H]
                f_g = sg[:, H:2 * H]
                o_g = sg[:, 2 * H:3 * H]
                g_g = jnp.tanh(g[:, 3 * H:])
                c_new = f_g * cs[l] + i_g * g_g
                h_new = o_g * jnp.tanh(c_new)
                hs[l] = h_new
                cs[l] = c_new
                if l == L - 1:
                    y_last[t] = h_new

        # Final hidden/cell states, packed lane-dense: [h_0|c_0|h_1|c_1|...]
        hcT_ref[...] = jnp.concatenate(
            [v for l in range(L) for v in (hs[l], cs[l])], axis=1)  # (Bp, L*2H)

        # ------------------------------------------------------------------
        # A_t / B_t generation for ALL time steps in one MXU pass.
        # ------------------------------------------------------------------
        y = jnp.concatenate(y_last, axis=0).astype(bf16)            # (TBp, H)
        ab = jnp.dot(y, wab_ref[...],
                     preferred_element_type=f32) + bab_ref[...]     # (TBp, SS+SC)
        a_all = ab[:, :SS]
        b_all = ab[:, SS:]

        # State-independent half of the recursion: sb_t = B_t @ u_t, all t.
        ru = sel_ref[SS:, :]                                        # (S*C, S)
        sb_all = jnp.dot((b_all * u_tiled).astype(bf16), ru,
                         preferred_element_type=f32)                # (TBp, S)

        # ------------------------------------------------------------------
        # Serial switched-state recursion: registers only, one matmul / step.
        # ------------------------------------------------------------------
        rs = sel_ref[:SS, :]                                        # (S*S, S)
        state = s0_ref[...]                                         # (Bp, S)
        st_list = []
        for t in range(T):                                          # static unroll
            r0 = t * Bp
            s_tiled = jnp.concatenate([state] * S, axis=1)          # (Bp, S*S)
            prod = a_all[r0:r0 + Bp, :] * s_tiled
            state = (jnp.dot(prod.astype(bf16), rs,
                             preferred_element_type=f32)
                     + sb_all[r0:r0 + Bp, :])
            st_list.append(state)
        st_all = jnp.concatenate(st_list, axis=0)                   # (TBp, S)

        # Output projection C, one matmul for all time steps.
        out_all = jnp.dot(st_all.astype(bf16), ct_ref[...],
                          preferred_element_type=f32)               # (TBp, O)

        # One lane-dense packed store: [A | B | states | outputs | zero pad].
        pieces = [ab, st_all, out_all]
        if PAD > 0:
            pieces.append(jnp.zeros((TBp, PAD), f32))
        slab_ref[...] = jnp.concatenate(pieces, axis=1)             # (TBp, P)

    return kernel


# ----------------------------------------------------------------------------
# One-time parameter preparation (gate reorder, wavefront block weight, fusions)
# ----------------------------------------------------------------------------
def prepare_params(params, control_dim, state_dim, output_dim, recurrent_dim):
    H = recurrent_dim
    S, C = state_dim, control_dim
    L = len(params['lstm'])
    G4 = 4 * H

    def reorder(w):  # PyTorch gate order [i|f|g|o] -> [i|f|o|g] along axis 0
        return jnp.concatenate([w[:2 * H], w[3 * H:4 * H], w[2 * H:3 * H]], axis=0)

    # Layer-0 input projection fused with the control-tiling selection Eu.
    eu = jnp.tile(jnp.eye(C, dtype=jnp.float32), (1, S))                  # (C, S*C)
    w0x = jnp.concatenate(
        [jnp.transpose(reorder(params['lstm'][0]['wih'])), eu], axis=1)   # (C, 4H+S*C)

    # Wavefront block weight: block (l,l)=W_hh[l]^T, block (l,l+1)=W_ih[l+1]^T.
    wcomb = jnp.zeros((L * H, L * G4), jnp.float32)
    bcomb = []
    for l in range(L):
        lp = params['lstm'][l]
        wcomb = wcomb.at[l * H:(l + 1) * H, l * G4:(l + 1) * G4].set(
            jnp.transpose(reorder(lp['whh'])))
        if l + 1 < L:
            wcomb = wcomb.at[l * H:(l + 1) * H, (l + 1) * G4:(l + 2) * G4].set(
                jnp.transpose(reorder(params['lstm'][l + 1]['wih'])))
        bcomb.append(reorder(lp['bih'] + lp['bhh']))
    bcomb = jnp.concatenate(bcomb)[None, :]                               # (1, L*4H)

    wab = jnp.concatenate([params['gen_A_w'].T, params['gen_B_w'].T], axis=1)
    bab = jnp.concatenate([params['gen_A_b'], params['gen_B_b']])[None, :]
    ct = params['C_w'].T                                                  # (S, O)

    eyeS = jnp.eye(S, dtype=jnp.float32)
    rs = jnp.kron(eyeS, jnp.ones((S, 1), jnp.float32))                    # (S*S, S)
    ru = jnp.kron(eyeS, jnp.ones((C, 1), jnp.float32))                    # (S*C, S)
    sel = jnp.concatenate([rs, ru], axis=0)                               # (S*S+S*C, S)

    bf16 = jnp.bfloat16
    return {
        'w0x': w0x.astype(bf16),
        'wcomb': wcomb.astype(bf16),
        'bcomb': bcomb.astype(jnp.float32),
        'wab': wab.astype(bf16),
        'bab': bab.astype(jnp.float32),
        'ct': ct.astype(bf16),
        'sel': sel.astype(bf16),
    }


# ----------------------------------------------------------------------------
# Jitted fused forward pass
# ----------------------------------------------------------------------------
@jax.jit
def pallas_forward(prep, control, previous_output, previous_state=None, hx=None):
    B, T, C = control.shape
    S, O = prep['ct'].shape
    H = (prep['w0x'].shape[1] - S * C) // 4
    L = prep['wcomb'].shape[0] // H
    SS, SC = S * S, S * C
    RAW = SS + SC + S + O
    P = _round_up(max(RAW, 128), 128)
    Bp = _round_up(max(B, 8), 8)
    TBp = T * Bp
    f32 = jnp.float32

    # batch-first -> time-major, batch padded to a sublane multiple, flattened
    xt = jnp.transpose(control.astype(f32), (1, 0, 2))                    # (T, B, C)
    xflat = jnp.pad(xt, ((0, 0), (0, Bp - B), (0, 0))).reshape(TBp, C)

    # initial hidden/cell, packed [h_l | c_l] per layer along lanes
    if hx is None:
        hc0 = jnp.zeros((Bp, L * 2 * H), f32)
    else:
        h0, c0 = hx
        h0 = jnp.pad(h0.astype(f32), ((0, 0), (0, Bp - B), (0, 0)))
        c0 = jnp.pad(c0.astype(f32), ((0, 0), (0, Bp - B), (0, 0)))
        hc0 = jnp.concatenate([v for l in range(L) for v in (h0[l], c0[l])], axis=1)

    # initial switched state
    if previous_state is None:
        s0 = jnp.zeros((Bp, S), f32).at[:B, :O].set(previous_output.astype(f32))
    else:
        s0 = jnp.zeros((Bp, S), f32).at[:B].set(previous_state.astype(f32))

    kernel = _make_fused_kernel(L, T, Bp, H, S, C, O, P)
    vmem = pl.BlockSpec(memory_space=pltpu.MemorySpace.VMEM)

    inputs = (xflat, prep['w0x'], prep['wcomb'], prep['bcomb'], prep['wab'],
              prep['bab'], prep['ct'], prep['sel'], hc0, s0)

    out_shapes = (
        jax.ShapeDtypeStruct((TBp, P), f32),            # [A | B | states | outputs | pad]
        jax.ShapeDtypeStruct((Bp, L * 2 * H), f32),     # [h_l | c_l] per layer
    )

    slab, hcT = pl.pallas_call(
        kernel,
        out_shape=out_shapes,
        in_specs=[vmem] * len(inputs),
        out_specs=(vmem, vmem),
    )(*inputs)

    # unpack the lane-dense slab back into the PyTorch (batch, time, ...) layout
    sl = jnp.transpose(slab.reshape(T, Bp, P)[:, :B], (1, 0, 2))          # (B, T, P)
    A = sl[..., :SS].reshape(B, T, S, S)
    Bm = sl[..., SS:SS + SC].reshape(B, T, S, C)
    states = sl[..., SS + SC:SS + SC + S]
    outputs = sl[..., SS + SC + S:RAW]
    h_n = jnp.stack([hcT[:B, 2 * H * l:2 * H * l + H] for l in range(L)], axis=0)
    c_n = jnp.stack([hcT[:B, 2 * H * l + H:2 * H * (l + 1)] for l in range(L)], axis=0)
    return outputs, states, (h_n, c_n), A, Bm


# ----------------------------------------------------------------------------
# Parameters (deterministic synthetic init, shapes follow the PyTorch module)
# ----------------------------------------------------------------------------
def init_params(key, control_dim, state_dim, output_dim, recurrent_dim, num_layers):
    params = {'lstm': []}
    k = 1.0 / jnp.sqrt(recurrent_dim)
    for l in range(num_layers):
        in_dim = control_dim if l == 0 else recurrent_dim
        key, k1, k2, k3, k4 = jax.random.split(key, 5)
        params['lstm'].append({
            'wih': jax.random.uniform(k1, (4 * recurrent_dim, in_dim), jnp.float32, -k, k),
            'whh': jax.random.uniform(k2, (4 * recurrent_dim, recurrent_dim), jnp.float32, -k, k),
            'bih': jax.random.uniform(k3, (4 * recurrent_dim,), jnp.float32, -k, k),
            'bhh': jax.random.uniform(k4, (4 * recurrent_dim,), jnp.float32, -k, k),
        })
    kr = 1.0 / jnp.sqrt(recurrent_dim)
    ks = 1.0 / jnp.sqrt(state_dim)
    key, k1, k2, k3, k4, k5 = jax.random.split(key, 6)
    params['gen_A_w'] = jax.random.uniform(k1, (state_dim * state_dim, recurrent_dim), jnp.float32, -kr, kr)
    params['gen_A_b'] = jax.random.uniform(k2, (state_dim * state_dim,), jnp.float32, -kr, kr)
    params['gen_B_w'] = jax.random.uniform(k3, (state_dim * control_dim, recurrent_dim), jnp.float32, -kr, kr)
    params['gen_B_b'] = jax.random.uniform(k4, (state_dim * control_dim,), jnp.float32, -kr, kr)
    params['C_w'] = jax.random.uniform(k5, (output_dim, state_dim), jnp.float32, -ks, ks)
    return params


# ----------------------------------------------------------------------------
# Pure-JAX reference (mirrors the PyTorch forward, float32 throughout)
# ----------------------------------------------------------------------------
def reference_forward(params, control, previous_output,
                      control_dim, state_dim, output_dim, recurrent_dim,
                      previous_state=None):
    B, T, _ = control.shape
    x = control
    h_n, c_n = [], []
    for lp in params['lstm']:
        H = recurrent_dim
        h = jnp.zeros((B, H), jnp.float32)
        c = jnp.zeros((B, H), jnp.float32)
        ys = []
        for t in range(T):
            g = x[:, t] @ lp['wih'].T + h @ lp['whh'].T + lp['bih'] + lp['bhh']
            i = jax.nn.sigmoid(g[:, :H])
            f = jax.nn.sigmoid(g[:, H:2 * H])
            gg = jnp.tanh(g[:, 2 * H:3 * H])
            o = jax.nn.sigmoid(g[:, 3 * H:])
            c = f * c + i * gg
            h = o * jnp.tanh(c)
            ys.append(h)
        x = jnp.stack(ys, axis=1)
        h_n.append(h)
        c_n.append(c)
    y = x.reshape(B * T, recurrent_dim)
    A = (y @ params['gen_A_w'].T + params['gen_A_b']).reshape(B, T, state_dim, state_dim)
    Bm = (y @ params['gen_B_w'].T + params['gen_B_b']).reshape(B, T, state_dim, control_dim)
    if previous_state is None:
        state = jnp.zeros((B, state_dim), jnp.float32)
        state = state.at[:, :output_dim].set(previous_output)
    else:
        state = previous_state
    states = []
    for t in range(T):
        state = (jnp.einsum('bij,bj->bi', A[:, t], state)
                 + jnp.einsum('bij,bj->bi', Bm[:, t], control[:, t]))
        states.append(state)
    states = jnp.stack(states, axis=1)
    outputs = states @ params['C_w'].T
    return outputs, states, (jnp.stack(h_n, 0), jnp.stack(c_n, 0)), A, Bm


# ----------------------------------------------------------------------------
if __name__ == "__main__":
    key = jax.random.PRNGKey(0)
    B, T = 4, 8
    control_dim, state_dim, output_dim = 4, 8, 4
    recurrent_dim, num_layers = 32, 2

    key, kp, kc, ko = jax.random.split(key, 4)
    params = init_params(kp, control_dim, state_dim, output_dim, recurrent_dim, num_layers)
    control = jax.random.normal(kc, (B, T, control_dim), jnp.float32)
    previous_output = jax.random.normal(ko, (B, output_dim), jnp.float32)

    prep = jax.tree_util.tree_map(
        jax.block_until_ready,
        prepare_params(params, control_dim, state_dim, output_dim, recurrent_dim))

    out = pallas_forward(prep, control, previous_output)
    out = jax.block_until_ready(out)
    outputs, states, (h_n, c_n), A, Bm = out

    ref = reference_forward(params, control, previous_output,
                            control_dim, state_dim, output_dim, recurrent_dim)
    r_outputs, r_states, (r_h, r_c), r_A, r_B = ref

    for got, want in [(outputs, r_outputs), (states, r_states), (A, r_A),
                      (Bm, r_B), (h_n, r_h), (c_n, r_c)]:
        assert got.shape == want.shape, (got.shape, want.shape)
        assert jnp.allclose(got, want, rtol=2e-2, atol=2e-2), \
            float(jnp.max(jnp.abs(got - want)))

    print("KERNEL_OK")
</pallas_src>

<mosaic_0001>
module attributes {stable_mosaic.version = 11 : i64} {
  func.func @kernel(%arg0: memref<64x4xf32, #tpu.memory_space<vmem>>, %arg1: memref<4x160xbf16, #tpu.memory_space<vmem>>, %arg2: memref<64x256xbf16, #tpu.memory_space<vmem>>, %arg3: memref<1x256xf32, #tpu.memory_space<vmem>>, %arg4: memref<32x96xbf16, #tpu.memory_space<vmem>>, %arg5: memref<1x96xf32, #tpu.memory_space<vmem>>, %arg6: memref<8x4xbf16, #tpu.memory_space<vmem>>, %arg7: memref<96x8xbf16, #tpu.memory_space<vmem>>, %arg8: memref<8x128xf32, #tpu.memory_space<vmem>>, %arg9: memref<8x8xf32, #tpu.memory_space<vmem>>, %arg10: memref<64x128xf32, #tpu.memory_space<vmem>>, %arg11: memref<8x128xf32, #tpu.memory_space<vmem>>) attributes {dimension_semantics = [], scalar_prefetch = 0 : i64, scratch_operands = 0 : i64, tpu.core_type = #tpu.core_type<tc>} {
    %c0 = arith.constant 0 : index
    %c0_0 = arith.constant 0 : index
    %0 = vector.load %arg0[%c0, %c0_0] : memref<64x4xf32, #tpu.memory_space<vmem>>, vector<64x4xf32>
    %1 = arith.truncf %0 : vector<64x4xf32> to vector<64x4xbf16>
    %c0_1 = arith.constant 0 : index
    %c0_2 = arith.constant 0 : index
    %2 = vector.load %arg1[%c0_1, %c0_2] : memref<4x160xbf16, #tpu.memory_space<vmem>>, vector<4x160xbf16>
    %cst = arith.constant dense<0.000000e+00> : vector<64x160xf32>
    %3 = tpu.matmul %1, %2, %cst {dimension_numbers = #tpu.dot_dimension_numbers<[1], [0], [0], [1], [0, 0, 1, 1], [], []>} : vector<64x4xbf16>, vector<4x160xbf16>, vector<64x160xf32> -> vector<64x160xf32>
    %4 = vector.extract_strided_slice %3 {offsets = [0, 0], sizes = [64, 128], strides = [1, 1]} : vector<64x160xf32> to vector<64x128xf32>
    %5 = vector.extract_strided_slice %3 {offsets = [0, 128], sizes = [64, 32], strides = [1, 1]} : vector<64x160xf32> to vector<64x32xf32>
    %c0_3 = arith.constant 0 : index
    %c0_4 = arith.constant 0 : index
    %6 = vector.load %arg2[%c0_3, %c0_4] : memref<64x256xbf16, #tpu.memory_space<vmem>>, vector<64x256xbf16>
    %c0_5 = arith.constant 0 : index
    %c0_6 = arith.constant 0 : index
    %7 = vector.load %arg3[%c0_5, %c0_6] : memref<1x256xf32, #tpu.memory_space<vmem>>, vector<1x256xf32>
    %c0_7 = arith.constant 0 : index
    %c0_8 = arith.constant 0 : index
    %8 = vector.load %arg8[%c0_7, %c0_8] : memref<8x128xf32, #tpu.memory_space<vmem>>, vector<8x128xf32>
    %9 = vector.extract_strided_slice %8 {offsets = [0, 0], sizes = [8, 32], strides = [1, 1]} : vector<8x128xf32> to vector<8x32xf32>
    %10 = vector.extract_strided_slice %8 {offsets = [0, 64], sizes = [8, 32], strides = [1, 1]} : vector<8x128xf32> to vector<8x32xf32>
    %11 = vector.extract_strided_slice %8 {offsets = [0, 32], sizes = [8, 32], strides = [1, 1]} : vector<8x128xf32> to vector<8x32xf32>
    %12 = vector.extract_strided_slice %8 {offsets = [0, 96], sizes = [8, 32], strides = [1, 1]} : vector<8x128xf32> to vector<8x32xf32>
    %13 = tpu.concatenate %9, %10 in 1 : vector<8x32xf32>, vector<8x32xf32> -> vector<8x64xf32>
    %14 = arith.truncf %13 : vector<8x64xf32> to vector<8x64xbf16>
    %cst_9 = arith.constant dense<0.000000e+00> : vector<8x256xf32>
    %15 = tpu.matmul %14, %6, %cst_9 {dimension_numbers = #tpu.dot_dimension_numbers<[1], [0], [0], [1], [0, 0, 1, 1], [], []>} : vector<8x64xbf16>, vector<64x256xbf16>, vector<8x256xf32> -> vector<8x256xf32>
    %16 = vector.broadcast %7 : vector<1x256xf32> to vector<8x256xf32>
    %17 = arith.addf %15, %16 : vector<8x256xf32>
    %18 = vector.extract_strided_slice %17 {offsets = [0, 0], sizes = [8, 128], strides = [1, 1]} : vector<8x256xf32> to vector<8x128xf32>
    %19 = vector.extract_strided_slice %4 {offsets = [0, 0], sizes = [8, 128], strides = [1, 1]} : vector<64x128xf32> to vector<8x128xf32>
    %20 = arith.addf %18, %19 : vector<8x128xf32>
    %21 = vector.extract_strided_slice %20 {offsets = [0, 0], sizes = [8, 96], strides = [1, 1]} : vector<8x128xf32> to vector<8x96xf32>
    %22 = arith.negf %21 : vector<8x96xf32>
    %23 = math.exp %22 : vector<8x96xf32>
    %cst_10 = arith.constant 1.000000e+00 : f32
    %24 = vector.broadcast %cst_10 : f32 to vector<8x96xf32>
    %25 = arith.addf %24, %23 : vector<8x96xf32>
    %26 = arith.divf %24, %25 : vector<8x96xf32>
    %27 = vector.extract_strided_slice %26 {offsets = [0, 0], sizes = [8, 32], strides = [1, 1]} : vector<8x96xf32> to vector<8x32xf32>
    %28 = vector.extract_strided_slice %26 {offsets = [0, 32], sizes = [8, 32], strides = [1, 1]} : vector<8x96xf32> to vector<8x32xf32>
    %29 = vector.extract_strided_slice %26 {offsets = [0, 64], sizes = [8, 32], strides = [1, 1]} : vector<8x96xf32> to vector<8x32xf32>
    %30 = vector.extract_strided_slice %20 {offsets = [0, 96], sizes = [8, 32], strides = [1, 1]} : vector<8x128xf32> to vector<8x32xf32>
    %31 = math.tanh %30 : vector<8x32xf32>
    %32 = arith.mulf %28, %11 : vector<8x32xf32>
    %33 = arith.mulf %27, %31 : vector<8x32xf32>
    %34 = arith.addf %32, %33 : vector<8x32xf32>
    %35 = math.tanh %34 : vector<8x32xf32>
    %36 = arith.mulf %29, %35 : vector<8x32xf32>
    %37 = tpu.concatenate %36, %10 in 1 : vector<8x32xf32>, vector<8x32xf32> -> vector<8x64xf32>
    %38 = arith.truncf %37 : vector<8x64xf32> to vector<8x64xbf16>
    %cst_11 = arith.constant dense<0.000000e+00> : vector<8x256xf32>
    %39 = tpu.matmul %38, %6, %cst_11 {dimension_numbers = #tpu.dot_dimension_numbers<[1], [0], [0], [1], [0, 0, 1, 1], [], []>} : vector<8x64xbf16>, vector<64x256xbf16>, vector<8x256xf32> -> vector<8x256xf32>
    %40 = vector.broadcast %7 : vector<1x256xf32> to vector<8x256xf32>
    %41 = arith.addf %39, %40 : vector<8x256xf32>
    %42 = vector.extract_strided_slice %41 {offsets = [0, 0], sizes = [8, 128], strides = [1, 1]} : vector<8x256xf32> to vector<8x128xf32>
    %43 = vector.extract_strided_slice %4 {offsets = [8, 0], sizes = [8, 128], strides = [1, 1]} : vector<64x128xf32> to vector<8x128xf32>
    %44 = arith.addf %42, %43 : vector<8x128xf32>
    %45 = vector.extract_strided_slice %44 {offsets = [0, 0], sizes = [8, 96], strides = [1, 1]} : vector<8x128xf32> to vector<8x96xf32>
    %46 = arith.negf %45 : vector<8x96xf32>
    %47 = math.exp %46 : vector<8x96xf32>
    %cst_12 = arith.constant 1.000000e+00 : f32
    %48 = vector.broadcast %cst_12 : f32 to vector<8x96xf32>
    %49 = arith.addf %48, %47 : vector<8x96xf32>
    %50 = arith.divf %48, %49 : vector<8x96xf32>
    %51 = vector.extract_strided_slice %50 {offsets = [0, 0], sizes = [8, 32], strides = [1, 1]} : vector<8x96xf32> to vector<8x32xf32>
    %52 = vector.extract_strided_slice %50 {offsets = [0, 32], sizes = [8, 32], strides = [1, 1]} : vector<8x96xf32> to vector<8x32xf32>
    %53 = vector.extract_strided_slice %50 {offsets = [0, 64], sizes = [8, 32], strides = [1, 1]} : vector<8x96xf32> to vector<8x32xf32>
    %54 = vector.extract_strided_slice %44 {offsets = [0, 96], sizes = [8, 32], strides = [1, 1]} : vector<8x128xf32> to vector<8x32xf32>
    %55 = math.tanh %54 : vector<8x32xf32>
    %56 = arith.mulf %52, %34 : vector<8x32xf32>
    %57 = arith.mulf %51, %55 : vector<8x32xf32>
    %58 = arith.addf %56, %57 : vector<8x32xf32>
    %59 = math.tanh %58 : vector<8x32xf32>
    %60 = arith.mulf %53, %59 : vector<8x32xf32>
    %61 = vector.extract_strided_slice %41 {offsets = [0, 128], sizes = [8, 128], strides = [1, 1]} : vector<8x256xf32> to vector<8x128xf32>
    %62 = vector.extract_strided_slice %61 {offsets = [0, 0], sizes = [8, 96], strides = [1, 1]} : vector<8x128xf32> to vector<8x96xf32>
    %63 = arith.negf %62 : vector<8x96xf32>
    %64 = math.exp %63 : vector<8x96xf32>
    %cst_13 = arith.constant 1.000000e+00 : f32
    %65 = vector.broadcast %cst_13 : f32 to vector<8x96xf32>
    %66 = arith.addf %65, %64 : vector<8x96xf32>
    %67 = arith.divf %65, %66 : vector<8x96xf32>
    %68 = vector.extract_strided_slice %67 {offsets = [0, 0], sizes = [8, 32], strides = [1, 1]} : vector<8x96xf32> to vector<8x32xf32>
    %69 = vector.extract_strided_slice %67 {offsets = [0, 32], sizes = [8, 32], strides = [1, 1]} : vector<8x96xf32> to vector<8x32xf32>
    %70 = vector.extract_strided_slice %67 {offsets = [0, 64], sizes = [8, 32], strides = [1, 1]} : vector<8x96xf32> to vector<8x32xf32>
    %71 = vector.extract_strided_slice %61 {offsets = [0, 96], sizes = [8, 32], strides = [1, 1]} : vector<8x128xf32> to vector<8x32xf32>
    %72 = math.tanh %71 : vector<8x32xf32>
    %73 = arith.mulf %69, %12 : vector<8x32xf32>
    %74 = arith.mulf %68, %72 : vector<8x32xf32>
    %75 = arith.addf %73, %74 : vector<8x32xf32>
    %76 = math.tanh %75 : vector<8x32xf32>
    %77 = arith.mulf %70, %76 : vector<8x32xf32>
    %78 = tpu.concatenate %60, %77 in 1 : vector<8x32xf32>, vector<8x32xf32> -> vector<8x64xf32>
    %79 = arith.truncf %78 : vector<8x64xf32> to vector<8x64xbf16>
    %cst_14 = arith.constant dense<0.000000e+00> : vector<8x256xf32>
    %80 = tpu.matmul %79, %6, %cst_14 {dimension_numbers = #tpu.dot_dimension_numbers<[1], [0], [0], [1], [0, 0, 1, 1], [], []>} : vector<8x64xbf16>, vector<64x256xbf16>, vector<8x256xf32> -> vector<8x256xf32>
    %81 = vector.broadcast %7 : vector<1x256xf32> to vector<8x256xf32>
    %82 = arith.addf %80, %81 : vector<8x256xf32>
    %83 = vector.extract_strided_slice %82 {offsets = [0, 0], sizes = [8, 128], strides = [1, 1]} : vector<8x256xf32> to vector<8x128xf32>
    %84 = vector.extract_strided_slice %4 {offsets = [16, 0], sizes = [8, 128], strides = [1, 1]} : vector<64x128xf32> to vector<8x128xf32>
    %85 = arith.addf %83, %84 : vector<8x128xf32>
    %86 = vector.extract_strided_slice %85 {offsets = [0, 0], sizes = [8, 96], strides = [1, 1]} : vector<8x128xf32> to vector<8x96xf32>
    %87 = arith.negf %86 : vector<8x96xf32>
    %88 = math.exp %87 : vector<8x96xf32>
    %cst_15 = arith.constant 1.000000e+00 : f32
    %89 = vector.broadcast %cst_15 : f32 to vector<8x96xf32>
    %90 = arith.addf %89, %88 : vector<8x96xf32>
    %91 = arith.divf %89, %90 : vector<8x96xf32>
    %92 = vector.extract_strided_slice %91 {offsets = [0, 0], sizes = [8, 32], strides = [1, 1]} : vector<8x96xf32> to vector<8x32xf32>
    %93 = vector.extract_strided_slice %91 {offsets = [0, 32], sizes = [8, 32], strides = [1, 1]} : vector<8x96xf32> to vector<8x32xf32>
    %94 = vector.extract_strided_slice %91 {offsets = [0, 64], sizes = [8, 32], strides = [1, 1]} : vector<8x96xf32> to vector<8x32xf32>
    %95 = vector.extract_strided_slice %85 {offsets = [0, 96], sizes = [8, 32], strides = [1, 1]} : vector<8x128xf32> to vector<8x32xf32>
    %96 = math.tanh %95 : vector<8x32xf32>
    %97 = arith.mulf %93, %58 : vector<8x32xf32>
    %98 = arith.mulf %92, %96 : vector<8x32xf32>
    %99 = arith.addf %97, %98 : vector<8x32xf32>
    %100 = math.tanh %99 : vector<8x32xf32>
    %101 = arith.mulf %94, %100 : vector<8x32xf32>
    %102 = vector.extract_strided_slice %82 {offsets = [0, 128], sizes = [8, 128], strides = [1, 1]} : vector<8x256xf32> to vector<8x128xf32>
    %103 = vector.extract_strided_slice %102 {offsets = [0, 0], sizes = [8, 96], strides = [1, 1]} : vector<8x128xf32> to vector<8x96xf32>
    %104 = arith.negf %103 : vector<8x96xf32>
    %105 = math.exp %104 : vector<8x96xf32>
    %cst_16 = arith.constant 1.000000e+00 : f32
    %106 = vector.broadcast %cst_16 : f32 to vector<8x96xf32>
    %107 = arith.addf %106, %105 : vector<8x96xf32>
    %108 = arith.divf %106, %107 : vector<8x96xf32>
    %109 = vector.extract_strided_slice %108 {offsets = [0, 0], sizes = [8, 32], strides = [1, 1]} : vector<8x96xf32> to vector<8x32xf32>
    %110 = vector.extract_strided_slice %108 {offsets = [0, 32], sizes = [8, 32], strides = [1, 1]} : vector<8x96xf32> to vector<8x32xf32>
    %111 = vector.extract_strided_slice %108 {offsets = [0, 64], sizes = [8, 32], strides = [1, 1]} : vector<8x96xf32> to vector<8x32xf32>
    %112 = vector.extract_strided_slice %102 {offsets = [0, 96], sizes = [8, 32], strides = [1, 1]} : vector<8x128xf32> to vector<8x32xf32>
    %113 = math.tanh %112 : vector<8x32xf32>
    %114 = arith.mulf %110, %75 : vector<8x32xf32>
    %115 = arith.mulf %109, %113 : vector<8x32xf32>
    %116 = arith.addf %114, %115 : vector<8x32xf32>
    %117 = math.tanh %116 : vector<8x32xf32>
    %118 = arith.mulf %111, %117 : vector<8x32xf32>
    %119 = tpu.concatenate %101, %118 in 1 : vector<8x32xf32>, vector<8x32xf32> -> vector<8x64xf32>
    %120 = arith.truncf %119 : vector<8x64xf32> to vector<8x64xbf16>
    %cst_17 = arith.constant dense<0.000000e+00> : vector<8x256xf32>
    %121 = tpu.matmul %120, %6, %cst_17 {dimension_numbers = #tpu.dot_dimension_numbers<[1], [0], [0], [1], [0, 0, 1, 1], [], []>} : vector<8x64xbf16>, vector<64x256xbf16>, vector<8x256xf32> -> vector<8x256xf32>
    %122 = vector.broadcast %7 : vector<1x256xf32> to vector<8x256xf32>
    %123 = arith.addf %121, %122 : vector<8x256xf32>
    %124 = vector.extract_strided_slice %123 {offsets = [0, 0], sizes = [8, 128], strides = [1, 1]} : vector<8x256xf32> to vector<8x128xf32>
    %125 = vector.extract_strided_slice %4 {offsets = [24, 0], sizes = [8, 128], strides = [1, 1]} : vector<64x128xf32> to vector<8x128xf32>
    %126 = arith.addf %124, %125 : vector<8x128xf32>
    %127 = vector.extract_strided_slice %126 {offsets = [0, 0], sizes = [8, 96], strides = [1, 1]} : vector<8x128xf32> to vector<8x96xf32>
    %128 = arith.negf %127 : vector<8x96xf32>
    %129 = math.exp %128 : vector<8x96xf32>
    %cst_18 = arith.constant 1.000000e+00 : f32
    %130 = vector.broadcast %cst_18 : f32 to vector<8x96xf32>
    %131 = arith.addf %130, %129 : vector<8x96xf32>
    %132 = arith.divf %130, %131 : vector<8x96xf32>
    %133 = vector.extract_strided_slice %132 {offsets = [0, 0], sizes = [8, 32], strides = [1, 1]} : vector<8x96xf32> to vector<8x32xf32>
    %134 = vector.extract_strided_slice %132 {offsets = [0, 32], sizes = [8, 32], strides = [1, 1]} : vector<8x96xf32> to vector<8x32xf32>
    %135 = vector.extract_strided_slice %132 {offsets = [0, 64], sizes = [8, 32], strides = [1, 1]} : vector<8x96xf32> to vector<8x32xf32>
    %136 = vector.extract_strided_slice %126 {offsets = [0, 96], sizes = [8, 32], strides = [1, 1]} : vector<8x128xf32> to vector<8x32xf32>
    %137 = math.tanh %136 : vector<8x32xf32>
    %138 = arith.mulf %134, %99 : vector<8x32xf32>
    %139 = arith.mulf %133, %137 : vector<8x32xf32>
    %140 = arith.addf %138, %139 : vector<8x32xf32>
    %141 = math.tanh %140 : vector<8x32xf32>
    %142 = arith.mulf %135, %141 : vector<8x32xf32>
    %143 = vector.extract_strided_slice %123 {offsets = [0, 128], sizes = [8, 128], strides = [1, 1]} : vector<8x256xf32> to vector<8x128xf32>
    %144 = vector.extract_strided_slice %143 {offsets = [0, 0], sizes = [8, 96], strides = [1, 1]} : vector<8x128xf32> to vector<8x96xf32>
    %145 = arith.negf %144 : vector<8x96xf32>
    %146 = math.exp %145 : vector<8x96xf32>
    %cst_19 = arith.constant 1.000000e+00 : f32
    %147 = vector.broadcast %cst_19 : f32 to vector<8x96xf32>
    %148 = arith.addf %147, %146 : vector<8x96xf32>
    %149 = arith.divf %147, %148 : vector<8x96xf32>
    %150 = vector.extract_strided_slice %149 {offsets = [0, 0], sizes = [8, 32], strides = [1, 1]} : vector<8x96xf32> to vector<8x32xf32>
    %151 = vector.extract_strided_slice %149 {offsets = [0, 32], sizes = [8, 32], strides = [1, 1]} : vector<8x96xf32> to vector<8x32xf32>
    %152 = vector.extract_strided_slice %149 {offsets = [0, 64], sizes = [8, 32], strides = [1, 1]} : vector<8x96xf32> to vector<8x32xf32>
    %153 = vector.extract_strided_slice %143 {offsets = [0, 96], sizes = [8, 32], strides = [1, 1]} : vector<8x128xf32> to vector<8x32xf32>
    %154 = math.tanh %153 : vector<8x32xf32>
    %155 = arith.mulf %151, %116 : vector<8x32xf32>
    %156 = arith.mulf %150, %154 : vector<8x32xf32>
    %157 = arith.addf %155, %156 : vector<8x32xf32>
    %158 = math.tanh %157 : vector<8x32xf32>
    %159 = arith.mulf %152, %158 : vector<8x32xf32>
    %160 = tpu.concatenate %142, %159 in 1 : vector<8x32xf32>, vector<8x32xf32> -> vector<8x64xf32>
    %161 = arith.truncf %160 : vector<8x64xf32> to vector<8x64xbf16>
    %cst_20 = arith.constant dense<0.000000e+00> : vector<8x256xf32>
    %162 = tpu.matmul %161, %6, %cst_20 {dimension_numbers = #tpu.dot_dimension_numbers<[1], [0], [0], [1], [0, 0, 1, 1], [], []>} : vector<8x64xbf16>, vector<64x256xbf16>, vector<8x256xf32> -> vector<8x256xf32>
    %163 = vector.broadcast %7 : vector<1x256xf32> to vector<8x256xf32>
    %164 = arith.addf %162, %163 : vector<8x256xf32>
    %165 = vector.extract_strided_slice %164 {offsets = [0, 0], sizes = [8, 128], strides = [1, 1]} : vector<8x256xf32> to vector<8x128xf32>
    %166 = vector.extract_strided_slice %4 {offsets = [32, 0], sizes = [8, 128], strides = [1, 1]} : vector<64x128xf32> to vector<8x128xf32>
    %167 = arith.addf %165, %166 : vector<8x128xf32>
    %168 = vector.extract_strided_slice %167 {offsets = [0, 0], sizes = [8, 96], strides = [1, 1]} : vector<8x128xf32> to vector<8x96xf32>
    %169 = arith.negf %168 : vector<8x96xf32>
    %170 = math.exp %169 : vector<8x96xf32>
    %cst_21 = arith.constant 1.000000e+00 : f32
    %171 = vector.broadcast %cst_21 : f32 to vector<8x96xf32>
    %172 = arith.addf %171, %170 : vector<8x96xf32>
    %173 = arith.divf %171, %172 : vector<8x96xf32>
    %174 = vector.extract_strided_slice %173 {offsets = [0, 0], sizes = [8, 32], strides = [1, 1]} : vector<8x96xf32> to vector<8x32xf32>
    %175 = vector.extract_strided_slice %173 {offsets = [0, 32], sizes = [8, 32], strides = [1, 1]} : vector<8x96xf32> to vector<8x32xf32>
    %176 = vector.extract_strided_slice %173 {offsets = [0, 64], sizes = [8, 32], strides = [1, 1]} : vector<8x96xf32> to vector<8x32xf32>
    %177 = vector.extract_strided_slice %167 {offsets = [0, 96], sizes = [8, 32], strides = [1, 1]} : vector<8x128xf32> to vector<8x32xf32>
    %178 = math.tanh %177 : vector<8x32xf32>
    %179 = arith.mulf %175, %140 : vector<8x32xf32>
    %180 = arith.mulf %174, %178 : vector<8x32xf32>
    %181 = arith.addf %179, %180 : vector<8x32xf32>
    %182 = math.tanh %181 : vector<8x32xf32>
    %183 = arith.mulf %176, %182 : vector<8x32xf32>
    %184 = vector.extract_strided_slice %164 {offsets = [0, 128], sizes = [8, 128], strides = [1, 1]} : vector<8x256xf32> to vector<8x128xf32>
    %185 = vector.extract_strided_slice %184 {offsets = [0, 0], sizes = [8, 96], strides = [1, 1]} : vector<8x128xf32> to vector<8x96xf32>
    %186 = arith.negf %185 : vector<8x96xf32>
    %187 = math.exp %186 : vector<8x96xf32>
    %cst_22 = arith.constant 1.000000e+00 : f32
    %188 = vector.broadcast %cst_22 : f32 to vector<8x96xf32>
    %189 = arith.addf %188, %187 : vector<8x96xf32>
    %190 = arith.divf %188, %189 : vector<8x96xf32>
    %191 = vector.extract_strided_slice %190 {offsets = [0, 0], sizes = [8, 32], strides = [1, 1]} : vector<8x96xf32> to vector<8x32xf32>
    %192 = vector.extract_strided_slice %190 {offsets = [0, 32], sizes = [8, 32], strides = [1, 1]} : vector<8x96xf32> to vector<8x32xf32>
    %193 = vector.extract_strided_slice %190 {offsets = [0, 64], sizes = [8, 32], strides = [1, 1]} : vector<8x96xf32> to vector<8x32xf32>
    %194 = vector.extract_strided_slice %184 {offsets = [0, 96], sizes = [8, 32], strides = [1, 1]} : vector<8x128xf32> to vector<8x32xf32>
    %195 = math.tanh %194 : vector<8x32xf32>
    %196 = arith.mulf %192, %157 : vector<8x32xf32>
    %197 = arith.mulf %191, %195 : vector<8x32xf32>
    %198 = arith.addf %196, %197 : vector<8x32xf32>
    %199 = math.tanh %198 : vector<8x32xf32>
    %200 = arith.mulf %193, %199 : vector<8x32xf32>
    %201 = tpu.concatenate %183, %200 in 1 : vector<8x32xf32>, vector<8x32xf32> -> vector<8x64xf32>
    %202 = arith.truncf %201 : vector<8x64xf32> to vector<8x64xbf16>
    %cst_23 = arith.constant dense<0.000000e+00> : vector<8x256xf32>
    %203 = tpu.matmul %202, %6, %cst_23 {dimension_numbers = #tpu.dot_dimension_numbers<[1], [0], [0], [1], [0, 0, 1, 1], [], []>} : vector<8x64xbf16>, vector<64x256xbf16>, vector<8x256xf32> -> vector<8x256xf32>
    %204 = vector.broadcast %7 : vector<1x256xf32> to vector<8x256xf32>
    %205 = arith.addf %203, %204 : vector<8x256xf32>
    %206 = vector.extract_strided_slice %205 {offsets = [0, 0], sizes = [8, 128], strides = [1, 1]} : vector<8x256xf32> to vector<8x128xf32>
    %207 = vector.extract_strided_slice %4 {offsets = [40, 0], sizes = [8, 128], strides = [1, 1]} : vector<64x128xf32> to vector<8x128xf32>
    %208 = arith.addf %206, %207 : vector<8x128xf32>
    %209 = vector.extract_strided_slice %208 {offsets = [0, 0], sizes = [8, 96], strides = [1, 1]} : vector<8x128xf32> to vector<8x96xf32>
    %210 = arith.negf %209 : vector<8x96xf32>
    %211 = math.exp %210 : vector<8x96xf32>
    %cst_24 = arith.constant 1.000000e+00 : f32
    %212 = vector.broadcast %cst_24 : f32 to vector<8x96xf32>
    %213 = arith.addf %212, %211 : vector<8x96xf32>
    %214 = arith.divf %212, %213 : vector<8x96xf32>
    %215 = vector.extract_strided_slice %214 {offsets = [0, 0], sizes = [8, 32], strides = [1, 1]} : vector<8x96xf32> to vector<8x32xf32>
    %216 = vector.extract_strided_slice %214 {offsets = [0, 32], sizes = [8, 32], strides = [1, 1]} : vector<8x96xf32> to vector<8x32xf32>
    %217 = vector.extract_strided_slice %214 {offsets = [0, 64], sizes = [8, 32], strides = [1, 1]} : vector<8x96xf32> to vector<8x32xf32>
    %218 = vector.extract_strided_slice %208 {offsets = [0, 96], sizes = [8, 32], strides = [1, 1]} : vector<8x128xf32> to vector<8x32xf32>
    %219 = math.tanh %218 : vector<8x32xf32>
    %220 = arith.mulf %216, %181 : vector<8x32xf32>
    %221 = arith.mulf %215, %219 : vector<8x32xf32>
    %222 = arith.addf %220, %221 : vector<8x32xf32>
    %223 = math.tanh %222 : vector<8x32xf32>
    %224 = arith.mulf %217, %223 : vector<8x32xf32>
    %225 = vector.extract_strided_slice %205 {offsets = [0, 128], sizes = [8, 128], strides = [1, 1]} : vector<8x256xf32> to vector<8x128xf32>
    %226 = vector.extract_strided_slice %225 {offsets = [0, 0], sizes = [8, 96], strides = [1, 1]} : vector<8x128xf32> to vector<8x96xf32>
    %227 = arith.negf %226 : vector<8x96xf32>
    %228 = math.exp %227 : vector<8x96xf32>
    %cst_25 = arith.constant 1.000000e+00 : f32
    %229 = vector.broadcast %cst_25 : f32 to vector<8x96xf32>
    %230 = arith.addf %229, %228 : vector<8x96xf32>
    %231 = arith.divf %229, %230 : vector<8x96xf32>
    %232 = vector.extract_strided_slice %231 {offsets = [0, 0], sizes = [8, 32], strides = [1, 1]} : vector<8x96xf32> to vector<8x32xf32>
    %233 = vector.extract_strided_slice %231 {offsets = [0, 32], sizes = [8, 32], strides = [1, 1]} : vector<8x96xf32> to vector<8x32xf32>
    %234 = vector.extract_strided_slice %231 {offsets = [0, 64], sizes = [8, 32], strides = [1, 1]} : vector<8x96xf32> to vector<8x32xf32>
    %235 = vector.extract_strided_slice %225 {offsets = [0, 96], sizes = [8, 32], strides = [1, 1]} : vector<8x128xf32> to vector<8x32xf32>
    %236 = math.tanh %235 : vector<8x32xf32>
    %237 = arith.mulf %233, %198 : vector<8x32xf32>
    %238 = arith.mulf %232, %236 : vector<8x32xf32>
    %239 = arith.addf %237, %238 : vector<8x32xf32>
    %240 = math.tanh %239 : vector<8x32xf32>
    %241 = arith.mulf %234, %240 : vector<8x32xf32>
    %242 = tpu.concatenate %224, %241 in 1 : vector<8x32xf32>, vector<8x32xf32> -> vector<8x64xf32>
    %243 = arith.truncf %242 : vector<8x64xf32> to vector<8x64xbf16>
    %cst_26 = arith.constant dense<0.000000e+00> : vector<8x256xf32>
    %244 = tpu.matmul %243, %6, %cst_26 {dimension_numbers = #tpu.dot_dimension_numbers<[1], [0], [0], [1], [0, 0, 1, 1], [], []>} : vector<8x64xbf16>, vector<64x256xbf16>, vector<8x256xf32> -> vector<8x256xf32>
    %245 = vector.broadcast %7 : vector<1x256xf32> to vector<8x256xf32>
    %246 = arith.addf %244, %245 : vector<8x256xf32>
    %247 = vector.extract_strided_slice %246 {offsets = [0, 0], sizes = [8, 128], strides = [1, 1]} : vector<8x256xf32> to vector<8x128xf32>
    %248 = vector.extract_strided_slice %4 {offsets = [48, 0], sizes = [8, 128], strides = [1, 1]} : vector<64x128xf32> to vector<8x128xf32>
    %249 = arith.addf %247, %248 : vector<8x128xf32>
    %250 = vector.extract_strided_slice %249 {offsets = [0, 0], sizes = [8, 96], strides = [1, 1]} : vector<8x128xf32> to vector<8x96xf32>
    %251 = arith.negf %250 : vector<8x96xf32>
    %252 = math.exp %251 : vector<8x96xf32>
    %cst_27 = arith.constant 1.000000e+00 : f32
    %253 = vector.broadcast %cst_27 : f32 to vector<8x96xf32>
    %254 = arith.addf %253, %252 : vector<8x96xf32>
    %255 = arith.divf %253, %254 : vector<8x96xf32>
    %256 = vector.extract_strided_slice %255 {offsets = [0, 0], sizes = [8, 32], strides = [1, 1]} : vector<8x96xf32> to vector<8x32xf32>
    %257 = vector.extract_strided_slice %255 {offsets = [0, 32], sizes = [8, 32], strides = [1, 1]} : vector<8x96xf32> to vector<8x32xf32>
    %258 = vector.extract_strided_slice %255 {offsets = [0, 64], sizes = [8, 32], strides = [1, 1]} : vector<8x96xf32> to vector<8x32xf32>
    %259 = vector.extract_strided_slice %249 {offsets = [0, 96], sizes = [8, 32], strides = [1, 1]} : vector<8x128xf32> to vector<8x32xf32>
    %260 = math.tanh %259 : vector<8x32xf32>
    %261 = arith.mulf %257, %222 : vector<8x32xf32>
    %262 = arith.mulf %256, %260 : vector<8x32xf32>
    %263 = arith.addf %261, %262 : vector<8x32xf32>
    %264 = math.tanh %263 : vector<8x32xf32>
    %265 = arith.mulf %258, %264 : vector<8x32xf32>
    %266 = vector.extract_strided_slice %246 {offsets = [0, 128], sizes = [8, 128], strides = [1, 1]} : vector<8x256xf32> to vector<8x128xf32>
    %267 = vector.extract_strided_slice %266 {offsets = [0, 0], sizes = [8, 96], strides = [1, 1]} : vector<8x128xf32> to vector<8x96xf32>
    %268 = arith.negf %267 : vector<8x96xf32>
    %269 = math.exp %268 : vector<8x96xf32>
    %cst_28 = arith.constant 1.000000e+00 : f32
    %270 = vector.broadcast %cst_28 : f32 to vector<8x96xf32>
    %271 = arith.addf %270, %269 : vector<8x96xf32>
    %272 = arith.divf %270, %271 : vector<8x96xf32>
    %273 = vector.extract_strided_slice %272 {offsets = [0, 0], sizes = [8, 32], strides = [1, 1]} : vector<8x96xf32> to vector<8x32xf32>
    %274 = vector.extract_strided_slice %272 {offsets = [0, 32], sizes = [8, 32], strides = [1, 1]} : vector<8x96xf32> to vector<8x32xf32>
    %275 = vector.extract_strided_slice %272 {offsets = [0, 64], sizes = [8, 32], strides = [1, 1]} : vector<8x96xf32> to vector<8x32xf32>
    %276 = vector.extract_strided_slice %266 {offsets = [0, 96], sizes = [8, 32], strides = [1, 1]} : vector<8x128xf32> to vector<8x32xf32>
    %277 = math.tanh %276 : vector<8x32xf32>
    %278 = arith.mulf %274, %239 : vector<8x32xf32>
    %279 = arith.mulf %273, %277 : vector<8x32xf32>
    %280 = arith.addf %278, %279 : vector<8x32xf32>
    %281 = math.tanh %280 : vector<8x32xf32>
    %282 = arith.mulf %275, %281 : vector<8x32xf32>
    %283 = tpu.concatenate %265, %282 in 1 : vector<8x32xf32>, vector<8x32xf32> -> vector<8x64xf32>
    %284 = arith.truncf %283 : vector<8x64xf32> to vector<8x64xbf16>
    %cst_29 = arith.constant dense<0.000000e+00> : vector<8x256xf32>
    %285 = tpu.matmul %284, %6, %cst_29 {dimension_numbers = #tpu.dot_dimension_numbers<[1], [0], [0], [1], [0, 0, 1, 1], [], []>} : vector<8x64xbf16>, vector<64x256xbf16>, vector<8x256xf32> -> vector<8x256xf32>
    %286 = vector.broadcast %7 : vector<1x256xf32> to vector<8x256xf32>
    %287 = arith.addf %285, %286 : vector<8x256xf32>
    %288 = vector.extract_strided_slice %287 {offsets = [0, 0], sizes = [8, 128], strides = [1, 1]} : vector<8x256xf32> to vector<8x128xf32>
    %289 = vector.extract_strided_slice %4 {offsets = [56, 0], sizes = [8, 128], strides = [1, 1]} : vector<64x128xf32> to vector<8x128xf32>
    %290 = arith.addf %288, %289 : vector<8x128xf32>
    %291 = vector.extract_strided_slice %290 {offsets = [0, 0], sizes = [8, 96], strides = [1, 1]} : vector<8x128xf32> to vector<8x96xf32>
    %292 = arith.negf %291 : vector<8x96xf32>
    %293 = math.exp %292 : vector<8x96xf32>
    %cst_30 = arith.constant 1.000000e+00 : f32
    %294 = vector.broadcast %cst_30 : f32 to vector<8x96xf32>
    %295 = arith.addf %294, %293 : vector<8x96xf32>
    %296 = arith.divf %294, %295 : vector<8x96xf32>
    %297 = vector.extract_strided_slice %296 {offsets = [0, 0], sizes = [8, 32], strides = [1, 1]} : vector<8x96xf32> to vector<8x32xf32>
    %298 = vector.extract_strided_slice %296 {offsets = [0, 32], sizes = [8, 32], strides = [1, 1]} : vector<8x96xf32> to vector<8x32xf32>
    %299 = vector.extract_strided_slice %296 {offsets = [0, 64], sizes = [8, 32], strides = [1, 1]} : vector<8x96xf32> to vector<8x32xf32>
    %300 = vector.extract_strided_slice %290 {offsets = [0, 96], sizes = [8, 32], strides = [1, 1]} : vector<8x128xf32> to vector<8x32xf32>
    %301 = math.tanh %300 : vector<8x32xf32>
    %302 = arith.mulf %298, %263 : vector<8x32xf32>
    %303 = arith.mulf %297, %301 : vector<8x32xf32>
    %304 = arith.addf %302, %303 : vector<8x32xf32>
    %305 = math.tanh %304 : vector<8x32xf32>
    %306 = arith.mulf %299, %305 : vector<8x32xf32>
    %307 = vector.extract_strided_slice %287 {offsets = [0, 128], sizes = [8, 128], strides = [1, 1]} : vector<8x256xf32> to vector<8x128xf32>
    %308 = vector.extract_strided_slice %307 {offsets = [0, 0], sizes = [8, 96], strides = [1, 1]} : vector<8x128xf32> to vector<8x96xf32>
    %309 = arith.negf %308 : vector<8x96xf32>
    %310 = math.exp %309 : vector<8x96xf32>
    %cst_31 = arith.constant 1.000000e+00 : f32
    %311 = vector.broadcast %cst_31 : f32 to vector<8x96xf32>
    %312 = arith.addf %311, %310 : vector<8x96xf32>
    %313 = arith.divf %311, %312 : vector<8x96xf32>
    %314 = vector.extract_strided_slice %313 {offsets = [0, 0], sizes = [8, 32], strides = [1, 1]} : vector<8x96xf32> to vector<8x32xf32>
    %315 = vector.extract_strided_slice %313 {offsets = [0, 32], sizes = [8, 32], strides = [1, 1]} : vector<8x96xf32> to vector<8x32xf32>
    %316 = vector.extract_strided_slice %313 {offsets = [0, 64], sizes = [8, 32], strides = [1, 1]} : vector<8x96xf32> to vector<8x32xf32>
    %317 = vector.extract_strided_slice %307 {offsets = [0, 96], sizes = [8, 32], strides = [1, 1]} : vector<8x128xf32> to vector<8x32xf32>
    %318 = math.tanh %317 : vector<8x32xf32>
    %319 = arith.mulf %315, %280 : vector<8x32xf32>
    %320 = arith.mulf %314, %318 : vector<8x32xf32>
    %321 = arith.addf %319, %320 : vector<8x32xf32>
    %322 = math.tanh %321 : vector<8x32xf32>
    %323 = arith.mulf %316, %322 : vector<8x32xf32>
    %324 = tpu.concatenate %306, %323 in 1 : vector<8x32xf32>, vector<8x32xf32> -> vector<8x64xf32>
    %325 = arith.truncf %324 : vector<8x64xf32> to vector<8x64xbf16>
    %cst_32 = arith.constant dense<0.000000e+00> : vector<8x256xf32>
    %326 = tpu.matmul %325, %6, %cst_32 {dimension_numbers = #tpu.dot_dimension_numbers<[1], [0], [0], [1], [0, 0, 1, 1], [], []>} : vector<8x64xbf16>, vector<64x256xbf16>, vector<8x256xf32> -> vector<8x256xf32>
    %327 = vector.broadcast %7 : vector<1x256xf32> to vector<8x256xf32>
    %328 = arith.addf %326, %327 : vector<8x256xf32>
    %329 = vector.extract_strided_slice %328 {offsets = [0, 128], sizes = [8, 128], strides = [1, 1]} : vector<8x256xf32> to vector<8x128xf32>
    %330 = vector.extract_strided_slice %329 {offsets = [0, 0], sizes = [8, 96], strides = [1, 1]} : vector<8x128xf32> to vector<8x96xf32>
    %331 = arith.negf %330 : vector<8x96xf32>
    %332 = math.exp %331 : vector<8x96xf32>
    %cst_33 = arith.constant 1.000000e+00 : f32
    %333 = vector.broadcast %cst_33 : f32 to vector<8x96xf32>
    %334 = arith.addf %333, %332 : vector<8x96xf32>
    %335 = arith.divf %333, %334 : vector<8x96xf32>
    %336 = vector.extract_strided_slice %335 {offsets = [0, 0], sizes = [8, 32], strides = [1, 1]} : vector<8x96xf32> to vector<8x32xf32>
    %337 = vector.extract_strided_slice %335 {offsets = [0, 32], sizes = [8, 32], strides = [1, 1]} : vector<8x96xf32> to vector<8x32xf32>
    %338 = vector.extract_strided_slice %335 {offsets = [0, 64], sizes = [8, 32], strides = [1, 1]} : vector<8x96xf32> to vector<8x32xf32>
    %339 = vector.extract_strided_slice %329 {offsets = [0, 96], sizes = [8, 32], strides = [1, 1]} : vector<8x128xf32> to vector<8x32xf32>
    %340 = math.tanh %339 : vector<8x32xf32>
    %341 = arith.mulf %337, %321 : vector<8x32xf32>
    %342 = arith.mulf %336, %340 : vector<8x32xf32>
    %343 = arith.addf %341, %342 : vector<8x32xf32>
    %344 = math.tanh %343 : vector<8x32xf32>
    %345 = arith.mulf %338, %344 : vector<8x32xf32>
    %346 = tpu.concatenate %306, %304, %345, %343 in 1 : vector<8x32xf32>, vector<8x32xf32>, vector<8x32xf32>, vector<8x32xf32> -> vector<8x128xf32>
    %c0_34 = arith.constant 0 : index
    %c0_35 = arith.constant 0 : index
    %347 = vector.load %arg11[%c0_34, %c0_35] : memref<8x128xf32, #tpu.memory_space<vmem>>, vector<8x128xf32>
    tpu.vector_store %arg11[%c0_34, %c0_35], %346 {strides = array<i32>} : memref<8x128xf32, #tpu.memory_space<vmem>>, vector<8x128xf32>,
    %348 = tpu.concatenate %77, %118, %159, %200, %241, %282, %323, %345 in 0 : vector<8x32xf32>, vector<8x32xf32>, vector<8x32xf32>, vector<8x32xf32>, vector<8x32xf32>, vector<8x32xf32>, vector<8x32xf32>, vector<8x32xf32> -> vector<64x32xf32>
    %349 = arith.truncf %348 : vector<64x32xf32> to vector<64x32xbf16>
    %c0_36 = arith.constant 0 : index
    %c0_37 = arith.constant 0 : index
    %350 = vector.load %arg4[%c0_36, %c0_37] : memref<32x96xbf16, #tpu.memory_space<vmem>>, vector<32x96xbf16>
    %cst_38 = arith.constant dense<0.000000e+00> : vector<64x96xf32>
    %351 = tpu.matmul %349, %350, %cst_38 {dimension_numbers = #tpu.dot_dimension_numbers<[1], [0], [0], [1], [0, 0, 1, 1], [], []>} : vector<64x32xbf16>, vector<32x96xbf16>, vector<64x96xf32> -> vector<64x96xf32>
    %c0_39 = arith.constant 0 : index
    %c0_40 = arith.constant 0 : index
    %352 = vector.load %arg5[%c0_39, %c0_40] : memref<1x96xf32, #tpu.memory_space<vmem>>, vector<1x96xf32>
    %353 = vector.broadcast %352 : vector<1x96xf32> to vector<64x96xf32>
    %354 = arith.addf %351, %353 : vector<64x96xf32>
    %355 = vector.extract_strided_slice %354 {offsets = [0, 0], sizes = [64, 64], strides = [1, 1]} : vector<64x96xf32> to vector<64x64xf32>
    %356 = vector.extract_strided_slice %354 {offsets = [0, 64], sizes = [64, 32], strides = [1, 1]} : vector<64x96xf32> to vector<64x32xf32>
    %c64 = arith.constant 64 : index
    %c0_41 = arith.constant 0 : index
    %357 = vector.load %arg7[%c64, %c0_41] : memref<96x8xbf16, #tpu.memory_space<vmem>>, vector<32x8xbf16>
    %358 = arith.mulf %356, %5 : vector<64x32xf32>
    %359 = arith.truncf %358 : vector<64x32xf32> to vector<64x32xbf16>
    %cst_42 = arith.constant dense<0.000000e+00> : vector<64x8xf32>
    %360 = tpu.matmul %359, %357, %cst_42 {dimension_numbers = #tpu.dot_dimension_numbers<[1], [0], [0], [1], [0, 0, 1, 1], [], []>} : vector<64x32xbf16>, vector<32x8xbf16>, vector<64x8xf32> -> vector<64x8xf32>
    %c0_43 = arith.constant 0 : index
    %c0_44 = arith.constant 0 : index
    %361 = vector.load %arg7[%c0_43, %c0_44] : memref<96x8xbf16, #tpu.memory_space<vmem>>, vector<64x8xbf16>
    %c0_45 = arith.constant 0 : index
    %c0_46 = arith.constant 0 : index
    %362 = vector.load %arg9[%c0_45, %c0_46] : memref<8x8xf32, #tpu.memory_space<vmem>>, vector<8x8xf32>
    %363 = tpu.concatenate %362, %362, %362, %362, %362, %362, %362, %362 in 1 : vector<8x8xf32>, vector<8x8xf32>, vector<8x8xf32>, vector<8x8xf32>, vector<8x8xf32>, vector<8x8xf32>, vector<8x8xf32>, vector<8x8xf32> -> vector<8x64xf32>
    %364 = vector.extract_strided_slice %355 {offsets = [0, 0], sizes = [8, 64], strides = [1, 1]} : vector<64x64xf32> to vector<8x64xf32>
    %365 = arith.mulf %364, %363 : vector<8x64xf32>
    %366 = arith.truncf %365 : vector<8x64xf32> to vector<8x64xbf16>
    %cst_47 = arith.constant dense<0.000000e+00> : vector<8x8xf32>
    %367 = tpu.matmul %366, %361, %cst_47 {dimension_numbers = #tpu.dot_dimension_numbers<[1], [0], [0], [1], [0, 0, 1, 1], [], []>} : vector<8x64xbf16>, vector<64x8xbf16>, vector<8x8xf32> -> vector<8x8xf32>
    %368 = vector.extract_strided_slice %360 {offsets = [0, 0], sizes = [8, 8], strides = [1, 1]} : vector<64x8xf32> to vector<8x8xf32>
    %369 = arith.addf %367, %368 : vector<8x8xf32>
    %370 = tpu.concatenate %369, %369, %369, %369, %369, %369, %369, %369 in 1 : vector<8x8xf32>, vector<8x8xf32>, vector<8x8xf32>, vector<8x8xf32>, vector<8x8xf32>, vector<8x8xf32>, vector<8x8xf32>, vector<8x8xf32> -> vector<8x64xf32>
    %371 = vector.extract_strided_slice %355 {offsets = [8, 0], sizes = [8, 64], strides = [1, 1]} : vector<64x64xf32> to vector<8x64xf32>
    %372 = arith.mulf %371, %370 : vector<8x64xf32>
    %373 = arith.truncf %372 : vector<8x64xf32> to vector<8x64xbf16>
    %cst_48 = arith.constant dense<0.000000e+00> : vector<8x8xf32>
    %374 = tpu.matmul %373, %361, %cst_48 {dimension_numbers = #tpu.dot_dimension_numbers<[1], [0], [0], [1], [0, 0, 1, 1], [], []>} : vector<8x64xbf16>, vector<64x8xbf16>, vector<8x8xf32> -> vector<8x8xf32>
    %375 = vector.extract_strided_slice %360 {offsets = [8, 0], sizes = [8, 8], strides = [1, 1]} : vector<64x8xf32> to vector<8x8xf32>
    %376 = arith.addf %374, %375 : vector<8x8xf32>
    %377 = tpu.concatenate %376, %376, %376, %376, %376, %376, %376, %376 in 1 : vector<8x8xf32>, vector<8x8xf32>, vector<8x8xf32>, vector<8x8xf32>, vector<8x8xf32>, vector<8x8xf32>, vector<8x8xf32>, vector<8x8xf32> -> vector<8x64xf32>
    %378 = vector.extract_strided_slice %355 {offsets = [16, 0], sizes = [8, 64], strides = [1, 1]} : vector<64x64xf32> to vector<8x64xf32>
    %379 = arith.mulf %378, %377 : vector<8x64xf32>
    %380 = arith.truncf %379 : vector<8x64xf32> to vector<8x64xbf16>
    %cst_49 = arith.constant dense<0.000000e+00> : vector<8x8xf32>
    %381 = tpu.matmul %380, %361, %cst_49 {dimension_numbers = #tpu.dot_dimension_numbers<[1], [0], [0], [1], [0, 0, 1, 1], [], []>} : vector<8x64xbf16>, vector<64x8xbf16>, vector<8x8xf32> -> vector<8x8xf32>
    %382 = vector.extract_strided_slice %360 {offsets = [16, 0], sizes = [8, 8], strides = [1, 1]} : vector<64x8xf32> to vector<8x8xf32>
    %383 = arith.addf %381, %382 : vector<8x8xf32>
    %384 = tpu.concatenate %383, %383, %383, %383, %383, %383, %383, %383 in 1 : vector<8x8xf32>, vector<8x8xf32>, vector<8x8xf32>, vector<8x8xf32>, vector<8x8xf32>, vector<8x8xf32>, vector<8x8xf32>, vector<8x8xf32> -> vector<8x64xf32>
    %385 = vector.extract_strided_slice %355 {offsets = [24, 0], sizes = [8, 64], strides = [1, 1]} : vector<64x64xf32> to vector<8x64xf32>
    %386 = arith.mulf %385, %384 : vector<8x64xf32>
    %387 = arith.truncf %386 : vector<8x64xf32> to vector<8x64xbf16>
    %cst_50 = arith.constant dense<0.000000e+00> : vector<8x8xf32>
    %388 = tpu.matmul %387, %361, %cst_50 {dimension_numbers = #tpu.dot_dimension_numbers<[1], [0], [0], [1], [0, 0, 1, 1], [], []>} : vector<8x64xbf16>, vector<64x8xbf16>, vector<8x8xf32> -> vector<8x8xf32>
    %389 = vector.extract_strided_slice %360 {offsets = [24, 0], sizes = [8, 8], strides = [1, 1]} : vector<64x8xf32> to vector<8x8xf32>
    %390 = arith.addf %388, %389 : vector<8x8xf32>
    %391 = tpu.concatenate %390, %390, %390, %390, %390, %390, %390, %390 in 1 : vector<8x8xf32>, vector<8x8xf32>, vector<8x8xf32>, vector<8x8xf32>, vector<8x8xf32>, vector<8x8xf32>, vector<8x8xf32>, vector<8x8xf32> -> vector<8x64xf32>
    %392 = vector.extract_strided_slice %355 {offsets = [32, 0], sizes = [8, 64], strides = [1, 1]} : vector<64x64xf32> to vector<8x64xf32>
    %393 = arith.mulf %392, %391 : vector<8x64xf32>
    %394 = arith.truncf %393 : vector<8x64xf32> to vector<8x64xbf16>
    %cst_51 = arith.constant dense<0.000000e+00> : vector<8x8xf32>
    %395 = tpu.matmul %394, %361, %cst_51 {dimension_numbers = #tpu.dot_dimension_numbers<[1], [0], [0], [1], [0, 0, 1, 1], [], []>} : vector<8x64xbf16>, vector<64x8xbf16>, vector<8x8xf32> -> vector<8x8xf32>
    %396 = vector.extract_strided_slice %360 {offsets = [32, 0], sizes = [8, 8], strides = [1, 1]} : vector<64x8xf32> to vector<8x8xf32>
    %397 = arith.addf %395, %396 : vector<8x8xf32>
    %398 = tpu.concatenate %397, %397, %397, %397, %397, %397, %397, %397 in 1 : vector<8x8xf32>, vector<8x8xf32>, vector<8x8xf32>, vector<8x8xf32>, vector<8x8xf32>, vector<8x8xf32>, vector<8x8xf32>, vector<8x8xf32> -> vector<8x64xf32>
    %399 = vector.extract_strided_slice %355 {offsets = [40, 0], sizes = [8, 64], strides = [1, 1]} : vector<64x64xf32> to vector<8x64xf32>
    %400 = arith.mulf %399, %398 : vector<8x64xf32>
    %401 = arith.truncf %400 : vector<8x64xf32> to vector<8x64xbf16>
    %cst_52 = arith.constant dense<0.000000e+00> : vector<8x8xf32>
    %402 = tpu.matmul %401, %361, %cst_52 {dimension_numbers = #tpu.dot_dimension_numbers<[1], [0], [0], [1], [0, 0, 1, 1], [], []>} : vector<8x64xbf16>, vector<64x8xbf16>, vector<8x8xf32> -> vector<8x8xf32>
    %403 = vector.extract_strided_slice %360 {offsets = [40, 0], sizes = [8, 8], strides = [1, 1]} : vector<64x8xf32> to vector<8x8xf32>
    %404 = arith.addf %402, %403 : vector<8x8xf32>
    %405 = tpu.concatenate %404, %404, %404, %404, %404, %404, %404, %404 in 1 : vector<8x8xf32>, vector<8x8xf32>, vector<8x8xf32>, vector<8x8xf32>, vector<8x8xf32>, vector<8x8xf32>, vector<8x8xf32>, vector<8x8xf32> -> vector<8x64xf32>
    %406 = vector.extract_strided_slice %355 {offsets = [48, 0], sizes = [8, 64], strides = [1, 1]} : vector<64x64xf32> to vector<8x64xf32>
    %407 = arith.mulf %406, %405 : vector<8x64xf32>
    %408 = arith.truncf %407 : vector<8x64xf32> to vector<8x64xbf16>
    %cst_53 = arith.constant dense<0.000000e+00> : vector<8x8xf32>
    %409 = tpu.matmul %408, %361, %cst_53 {dimension_numbers = #tpu.dot_dimension_numbers<[1], [0], [0], [1], [0, 0, 1, 1], [], []>} : vector<8x64xbf16>, vector<64x8xbf16>, vector<8x8xf32> -> vector<8x8xf32>
    %410 = vector.extract_strided_slice %360 {offsets = [48, 0], sizes = [8, 8], strides = [1, 1]} : vector<64x8xf32> to vector<8x8xf32>
    %411 = arith.addf %409, %410 : vector<8x8xf32>
    %412 = tpu.concatenate %411, %411, %411, %411, %411, %411, %411, %411 in 1 : vector<8x8xf32>, vector<8x8xf32>, vector<8x8xf32>, vector<8x8xf32>, vector<8x8xf32>, vector<8x8xf32>, vector<8x8xf32>, vector<8x8xf32> -> vector<8x64xf32>
    %413 = vector.extract_strided_slice %355 {offsets = [56, 0], sizes = [8, 64], strides = [1, 1]} : vector<64x64xf32> to vector<8x64xf32>
    %414 = arith.mulf %413, %412 : vector<8x64xf32>
    %415 = arith.truncf %414 : vector<8x64xf32> to vector<8x64xbf16>
    %cst_54 = arith.constant dense<0.000000e+00> : vector<8x8xf32>
    %416 = tpu.matmul %415, %361, %cst_54 {dimension_numbers = #tpu.dot_dimension_numbers<[1], [0], [0], [1], [0, 0, 1, 1], [], []>} : vector<8x64xbf16>, vector<64x8xbf16>, vector<8x8xf32> -> vector<8x8xf32>
    %417 = vector.extract_strided_slice %360 {offsets = [56, 0], sizes = [8, 8], strides = [1, 1]} : vector<64x8xf32> to vector<8x8xf32>
    %418 = arith.addf %416, %417 : vector<8x8xf32>
    %419 = tpu.concatenate %369, %376, %383, %390, %397, %404, %411, %418 in 0 : vector<8x8xf32>, vector<8x8xf32>, vector<8x8xf32>, vector<8x8xf32>, vector<8x8xf32>, vector<8x8xf32>, vector<8x8xf32>, vector<8x8xf32> -> vector<64x8xf32>
    %420 = arith.truncf %419 : vector<64x8xf32> to vector<64x8xbf16>
    %c0_55 = arith.constant 0 : index
    %c0_56 = arith.constant 0 : index
    %421 = vector.load %arg6[%c0_55, %c0_56] : memref<8x4xbf16, #tpu.memory_space<vmem>>, vector<8x4xbf16>
    %cst_57 = arith.constant dense<0.000000e+00> : vector<64x4xf32>
    %422 = tpu.matmul %420, %421, %cst_57 {dimension_numbers = #tpu.dot_dimension_numbers<[1], [0], [0], [1], [0, 0, 1, 1], [], []>} : vector<64x8xbf16>, vector<8x4xbf16>, vector<64x4xf32> -> vector<64x4xf32>
    %cst_58 = arith.constant 0.000000e+00 : f32
    %423 = vector.broadcast %cst_58 : f32 to vector<64x20xf32>
    %424 = tpu.concatenate %354, %419, %422, %423 in 1 : vector<64x96xf32>, vector<64x8xf32>, vector<64x4xf32>, vector<64x20xf32> -> vector<64x128xf32>
    %c0_59 = arith.constant 0 : index
    %c0_60 = arith.constant 0 : index
    %425 = vector.load %arg10[%c0_59, %c0_60] : memref<64x128xf32, #tpu.memory_space<vmem>>, vector<64x128xf32>
    tpu.vector_store %arg10[%c0_59, %c0_60], %424 {strides = array<i32>} : memref<64x128xf32, #tpu.memory_space<vmem>>, vector<64x128xf32>,
    return
  }
}

</mosaic_0001>

<llo_original>
// kernel: pallas_forward.1
$region0: #{pallas_forward.1}
  #allocation0 [shape = 'u32[]', space=smem, size = 0x4, offset = 0x4, fixed_abs, tag = 'smem constant byte address 0x4 - core index']
  #allocation1 [shape = 'u32[144,128]{1,0:T(1,128)}', space=vmem, size = 0x12000, scoped, tag = 'internal scratch']
  %s0 = inlined_call_operand.vmem [shape: f32[64,4], index: 0, kind: input, shape index: {}]
  %s1 = inlined_call_operand.vmem [shape: bf16[4,160], index: 1, kind: input, shape index: {}]
  %s2 = inlined_call_operand.vmem [shape: bf16[64,256], index: 2, kind: input, shape index: {}]
  %s3 = inlined_call_operand.vmem [shape: f32[1,256], index: 3, kind: input, shape index: {}]
  %s4 = inlined_call_operand.vmem [shape: bf16[32,96], index: 4, kind: input, shape index: {}]
  %s5 = inlined_call_operand.vmem [shape: f32[1,96], index: 5, kind: input, shape index: {}]
  %s6 = inlined_call_operand.vmem [shape: bf16[8,4], index: 6, kind: input, shape index: {}]
  %s7 = inlined_call_operand.vmem [shape: bf16[96,8], index: 7, kind: input, shape index: {}]
  %s8 = inlined_call_operand.vmem [shape: f32[8,128], index: 8, kind: input, shape index: {}]
  %s9 = inlined_call_operand.vmem [shape: f32[8,8], index: 9, kind: input, shape index: {}]
  %s10 = inlined_call_operand.vmem [shape: f32[64,128], index: 10, kind: output, shape index: {0}]
  %s11 = inlined_call_operand.vmem [shape: f32[8,128], index: 11, kind: output, shape index: {1}]
  %12 = xla_tuple %s10, %s11
  %s13 = sld [smem:[#allocation0]]
  $region58: #{pallas_forward.1} parent=0
    _
  %s15 = ssub.s32 1, %s13
  %s16 = scalar_select 0, %s15, %s13
  // Predicated region
  $region2: #{pallas_forward.1} parent=0 // pred_check
    _
  $region3: #{pallas_forward.1} parent=0 // pred_check_branch
    %18 = sbr.rel (0) target = $region5
  $region4: #{pallas_forward.1} parent=0 // pred_region
    _
  $region5: #{pallas_forward.1} parent=0 // pred_fallthru
    _
  // Predicated region
  $region6: #{pallas_forward.1} parent=0 // pred_check
    _
  $region7: #{pallas_forward.1} parent=0 // pred_check_branch
    %20 = sbr.rel (0) target = $region9
  $region8: #{pallas_forward.1} parent=0 // pred_region
    _
  $region9: #{pallas_forward.1} parent=0 // pred_fallthru
    _
  // Predicated region
  $region10: #{pallas_forward.1} parent=0 // pred_check
    _
  $region11: #{pallas_forward.1} parent=0 // pred_check_branch
    %22 = sbr.rel (0) target = $region13
  $region12: #{pallas_forward.1} parent=0 // pred_region
    _
  $region13: #{pallas_forward.1} parent=0 // pred_fallthru
    _
  // Predicated region
  $region14: #{pallas_forward.1} parent=0 // pred_check
    _
  $region15: #{pallas_forward.1} parent=0 // pred_check_branch
    %24 = sbr.rel (0) target = $region17
  $region16: #{pallas_forward.1} parent=0 // pred_region
    _
  $region17: #{pallas_forward.1} parent=0 // pred_fallthru
    _
  // Predicated region
  $region18: #{pallas_forward.1} parent=0 // pred_check
    _
  $region19: #{pallas_forward.1} parent=0 // pred_check_branch
    %26 = sbr.rel (0) target = $region21
  $region20: #{pallas_forward.1} parent=0 // pred_region
    _
  $region21: #{pallas_forward.1} parent=0 // pred_fallthru
    _
  // Predicated region
  $region22: #{pallas_forward.1} parent=0 // pred_check
    _
  $region23: #{pallas_forward.1} parent=0 // pred_check_branch
    %28 = sbr.rel (0) target = $region25
  $region24: #{pallas_forward.1} parent=0 // pred_region
    _
  $region25: #{pallas_forward.1} parent=0 // pred_fallthru
    _
  // Predicated region
  $region26: #{pallas_forward.1} parent=0 // pred_check
    _
  $region27: #{pallas_forward.1} parent=0 // pred_check_branch
    %30 = sbr.rel (0) target = $region29
  $region28: #{pallas_forward.1} parent=0 // pred_region
    _
  $region29: #{pallas_forward.1} parent=0 // pred_fallthru
    _
  // Predicated region
  $region30: #{pallas_forward.1} parent=0 // pred_check
    _
  $region31: #{pallas_forward.1} parent=0 // pred_check_branch
    %32 = sbr.rel (0) target = $region33
  $region32: #{pallas_forward.1} parent=0 // pred_region
    _
  $region33: #{pallas_forward.1} parent=0 // pred_fallthru
    _
  // Predicated region
  $region34: #{pallas_forward.1} parent=0 // pred_check
    _
  $region35: #{pallas_forward.1} parent=0 // pred_check_branch
    %34 = sbr.rel (0) target = $region37
  $region36: #{pallas_forward.1} parent=0 // pred_region
    _
  $region37: #{pallas_forward.1} parent=0 // pred_fallthru
    _
  // Predicated region
  $region38: #{pallas_forward.1} parent=0 // pred_check
    _
  $region39: #{pallas_forward.1} parent=0 // pred_check_branch
    %36 = sbr.rel (0) target = $region41
  $region40: #{pallas_forward.1} parent=0 // pred_region
    _
  $region41: #{pallas_forward.1} parent=0 // pred_fallthru
    _
  %v38 = vld [vmem:[%s0] sm:$0xff]
  %v39 = vld [vmem:[%s0 + $0x8] sm:$0xff]
  %v40 = vld [vmem:[%s0 + $0x10] sm:$0xff]
  %v41 = vld [vmem:[%s0 + $0x18] sm:$0xff]
  %v42 = vld [vmem:[%s0 + $0x20] sm:$0xff]
  %v43 = vld [vmem:[%s0 + $0x28] sm:$0xff]
  %v44 = vld [vmem:[%s0 + $0x30] sm:$0xff]
  %v45 = vld [vmem:[%s0 + $0x38] sm:$0xff]
  %v46 = vpack.c.bf16 %v39, %v38
  %v47 = vpack.c.bf16 %v41, %v40
  %v48 = vpack.c.bf16 %v43, %v42
  %v49 = vpack.c.bf16 %v45, %v44
  %v50 = vld [vmem:[%s1] sm:$0xf]
  %v53 = vunpack.c.l.s4 1983009808
  %v54 = vunpack.c.0.s8 %v53
  %v55 = vlaneseq
  %v56 = vshrl.u32 %v55, 7
  %v57 = vsub.s32 %v54, %v56
  %v58 = vrot.slane %v50, %v57
  %v59 = vcombine.high %v58, %v58
  %vm60 = vcmask 31744
  %v62 = vsel %vm60, %v46, 0
  %v65 = vsel %vm60, %v47, 0
  %v68 = vsel %vm60, %v48, 0
  %v71 = vsel %vm60, %v49, 0
  %vm73 = vcmask 1041408
  %v75 = vsel %vm73, %v58, 0
  %v78 = vsel %vm73, %v59, 0
  %80 = vmatprep.subr.bf16.mxu0 %v78
  %81 = vmatpush1.bf16.msra.mxu0 %v75
  %82 = vmatprep.subr.bf16.mxu0 0
  %83 = vmatpush1.bf16.msra.mxu0 0
  %84 = vmatprep.subr.bf16.mxu0 0
  %85 = vmatpush1.bf16.msra.mxu0 0
  %86 = vmatprep.subr.bf16.mxu0 0
  %87 = vmatpush1.bf16.msra.mxu0 0
  %88 = vmatprep.subr.bf16.mxu0 0
  %89 = vmatpush1.bf16.msra.mxu0 0
  %90 = vmatprep.subr.bf16.mxu0 0
  %91 = vmatpush1.bf16.msra.mxu0 0
  %92 = vmatprep.subr.bf16.mxu0 0
  %93 = vmatpush1.bf16.msra.mxu0 0
  %94 = vmatprep.subr.bf16.mxu0 0
  %95 = vmatpush1.bf16.msra.mxu0 0
  %96 = vmatprep.subr.bf16.mxu0 0
  %97 = vmatpush1.bf16.msra.mxu0 0
  %98 = vmatprep.subr.bf16.mxu0 0
  %99 = vmatpush1.bf16.msra.mxu0 0
  %100 = vmatprep.subr.bf16.mxu0 0
  %101 = vmatpush1.bf16.msra.mxu0 0
  %102 = vmatprep.subr.bf16.mxu0 0
  %103 = vmatpush1.bf16.msra.mxu0 0
  %104 = vmatprep.subr.bf16.mxu0 0
  %105 = vmatpush1.bf16.msra.mxu0 0
  %106 = vmatprep.subr.bf16.mxu0 0
  %107 = vmatpush1.bf16.msra.mxu0 0
  %108 = vmatprep.subr.bf16.mxu0 0
  %109 = vmatpush1.bf16.msra.mxu0 0
  %110 = vmatprep.subr.bf16.mxu0 0
  %111 = vmatpush1.bf16.msra.mxu0 0
  %112 = vmatprep.mubr.bf16.mxu0 0
  %113 = vmatmul.mubr.bf16.gmra.mrb[0].mxu0 %v62
  %v114 = vpop.f32.mrb[0].mxu0
  %v115 = vadd.f32 0.0, %v114
  %v116 = vpop.f32.mrb[0].mxu0
  %v117 = vadd.f32 0.0, %v116
  %v118 = vpop.f32.mrb[0].mxu0
  %v119 = vadd.f32 0.0, %v118
  %v120 = vpop.f32.mrb[0].mxu0
  %v121 = vadd.f32 0.0, %v120
  %122 = vmatprep.mubr.bf16.mxu0 0
  %123 = vmatmul.mubr.bf16.gmra.mrb[0].mxu0 %v65
  %v124 = vpop.f32.mrb[0].mxu0
  %v125 = vadd.f32 0.0, %v124
  %v126 = vpop.f32.mrb[0].mxu0
  %v127 = vadd.f32 0.0, %v126
  %v128 = vpop.f32.mrb[0].mxu0
  %v129 = vadd.f32 0.0, %v128
  %v130 = vpop.f32.mrb[0].mxu0
  %v131 = vadd.f32 0.0, %v130
  %132 = vmatprep.mubr.bf16.mxu0 0
  %133 = vmatmul.mubr.bf16.gmra.mrb[0].mxu0 %v68
  %v134 = vpop.f32.mrb[0].mxu0
  %v135 = vadd.f32 0.0, %v134
  %v136 = vpop.f32.mrb[0].mxu0
  %v137 = vadd.f32 0.0, %v136
  %v138 = vpop.f32.mrb[0].mxu0
  %v139 = vadd.f32 0.0, %v138
  %v140 = vpop.f32.mrb[0].mxu0
  %v141 = vadd.f32 0.0, %v140
  %142 = vmatprep.mubr.bf16.mxu0 0
  %143 = vmatmul.mubr.bf16.gmra.mrb[0].mxu0 %v71
  %v144 = vpop.f32.mrb[0].mxu0
  %v145 = vadd.f32 0.0, %v144
  %v146 = vpop.f32.mrb[0].mxu0
  %v147 = vadd.f32 0.0, %v146
  %v148 = vpop.f32.mrb[0].mxu0
  %v149 = vadd.f32 0.0, %v148
  %v150 = vpop.f32.mrb[0].mxu0
  %v151 = vadd.f32 0.0, %v150
  %152 = vdwg.mxu0
  %v153 = vld [vmem:[%s2] sm:$0xff]
  %v154 = vld [vmem:[%s2 + $0x8] sm:$0xff]
  %v155 = vld [vmem:[%s2 + $0x10] sm:$0xff]
  %v156 = vld [vmem:[%s2 + $0x18] sm:$0xff]
  %v157 = vld [vmem:[%s2 + $0x20] sm:$0xff]
  %v158 = vld [vmem:[%s2 + $0x28] sm:$0xff]
  %v159 = vld [vmem:[%s2 + $0x30] sm:$0xff]
  %v160 = vld [vmem:[%s2 + $0x38] sm:$0xff]
  %v161 = vld [vmem:[%s3] sm:$0x3]
  %v162 = vld [vmem:[%s8] sm:$0xff]
  %164 = vrot.lane.b32.xlu0 %v162, 96
  %v165 = vpop.permute.xlu0 %164
  %vm167 = vcmask 261120
  %v168 = vsel %vm167, %v162, %v165
  %v169 = vpack.c.bf16 %v168, %v168
  %v171 = vlaneseq
  %v172 = vshrl.u32 %v171, 7
  %v173 = vsub.s32 0, %v172
  %v174 = vrot.slane %v161, %v173
  %v175 = vlaneseq
  %v176 = vshrl.u32 %v175, 7
  %v177 = vsub.s32 1, %v176
  %v178 = vrot.slane %v161, %v177
  %v189 = vunpack.c.l.b16 %v153
  %v190 = vunpack.c.h.b16 %v153
  %v191 = vunpack.c.l.b16 %v154
  %v192 = vunpack.c.h.b16 %v154
  %v193 = vunpack.c.l.b16 %v155
  %v194 = vunpack.c.h.b16 %v155
  %v195 = vunpack.c.l.b16 %v156
  %v196 = vunpack.c.h.b16 %v156
  %v197 = vunpack.c.l.b16 %v157
  %v198 = vunpack.c.h.b16 %v157
  %v199 = vunpack.c.l.b16 %v158
  %v200 = vunpack.c.h.b16 %v158
  %v201 = vunpack.c.l.b16 %v159
  %v202 = vunpack.c.h.b16 %v159
  %v203 = vunpack.c.l.b16 %v160
  %v204 = vunpack.c.h.b16 %v160
  %v205 = vpack.c.b16 %v191, %v189
  %v206 = vpack.c.b16 %v192, %v190
  %v207 = vpack.c.b16 %v195, %v193
  %v208 = vpack.c.b16 %v196, %v194
  %v209 = vpack.c.b16 %v199, %v197
  %v210 = vpack.c.b16 %v200, %v198
  %v211 = vpack.c.b16 %v203, %v201
  %v212 = vpack.c.b16 %v204, %v202
  %vm221 = vcmask 523264
  %v223 = vsel %vm221, %v169, 0
  %225 = vmatprep.subr.bf16.mxu0 %v206
  %226 = vmatpush1.bf16.msra.mxu0 %v205
  %227 = vmatprep.subr.bf16.mxu0 %v208
  %228 = vmatpush1.bf16.msra.mxu0 %v207
  %229 = vmatprep.subr.bf16.mxu0 %v210
  %230 = vmatpush1.bf16.msra.mxu0 %v209
  %231 = vmatprep.subr.bf16.mxu0 %v212
  %232 = vmatpush1.bf16.msra.mxu0 %v211
  %233 = vmatprep.subr.bf16.mxu0 0
  %234 = vmatpush1.bf16.msra.mxu0 0
  %235 = vmatprep.subr.bf16.mxu0 0
  %236 = vmatpush1.bf16.msra.mxu0 0
  %237 = vmatprep.subr.bf16.mxu0 0
  %238 = vmatpush1.bf16.msra.mxu0 0
  %239 = vmatprep.subr.bf16.mxu0 0
  %240 = vmatpush1.bf16.msra.mxu0 0
  %241 = vmatprep.subr.bf16.mxu0 0
  %242 = vmatpush1.bf16.msra.mxu0 0
  %243 = vmatprep.subr.bf16.mxu0 0
  %244 = vmatpush1.bf16.msra.mxu0 0
  %245 = vmatprep.subr.bf16.mxu0 0
  %246 = vmatpush1.bf16.msra.mxu0 0
  %247 = vmatprep.subr.bf16.mxu0 0
  %248 = vmatpush1.bf16.msra.mxu0 0
  %249 = vmatprep.subr.bf16.mxu0 0
  %250 = vmatpush1.bf16.msra.mxu0 0
  %251 = vmatprep.subr.bf16.mxu0 0
  %252 = vmatpush1.bf16.msra.mxu0 0
  %253 = vmatprep.subr.bf16.mxu0 0
  %254 = vmatpush1.bf16.msra.mxu0 0
  %255 = vmatprep.subr.bf16.mxu0 0
  %256 = vmatpush1.bf16.msra.mxu0 0
  %257 = vmatprep.mubr.bf16.mxu0 0
  %258 = vmatmul.mubr.bf16.gmra.mrb[0].mxu0 %v223
  %v259 = vpop.f32.mrb[0].mxu0
  %v260 = vadd.f32 %v174, %v259
  %v261 = vpop.f32.mrb[0].mxu0
  %v262 = vpop.f32.mrb[0].mxu0
  %v263 = vpop.f32.mrb[0].mxu0
  %264 = vdwg.mxu0
  %v265 = vadd.f32 %v260, %v115
  %v266 = vxor.u32 %v265, 2147483648
  %v267 = vmul.f32 %v266, 1.442695
  %v268 = vpow.pop %v267
  %v269 = vadd.f32 %v268, 1.0
  %v270 = vrcp.pop %v269
  %v271 = vmul.f32 1.0, %v270
  %v272 = vtanh.pop %v265
  %v273 = vmul.f32 %v271, %v162
  %275 = vrot.lane.b32.xlu0 %v272, 32
  %v276 = vpop.permute.xlu0 %275
  %v278 = vmul.f32 %v271, %v276
  %280 = vrot.lane.b32.xlu0 %v278, 32
  %v281 = vpop.permute.xlu0 %280
  %v283 = vadd.f32 %v273, %v281
  %v284 = vtanh.pop %v283
  %286 = vrot.lane.b32.xlu0 %v284, 32
  %v287 = vpop.permute.xlu0 %286
  %v289 = vmul.f32 %v271, %v287
  %291 = vrot.lane.b32.xlu0 %v289, 64
  %v292 = vpop.permute.xlu0 %291
  %v294 = vsel %vm167, %v292, %v165
  %v295 = vpack.c.bf16 %v294, %v294
  %v297 = vsel %vm221, %v295, 0
  %299 = vmatprep.subr.bf16.mxu0 %v206
  %300 = vmatpush1.bf16.msra.mxu0 %v205
  %301 = vmatprep.subr.bf16.mxu0 %v208
  %302 = vmatpush1.bf16.msra.mxu0 %v207
  %303 = vmatprep.subr.bf16.mxu0 %v210
  %304 = vmatpush1.bf16.msra.mxu0 %v209
  %305 = vmatprep.subr.bf16.mxu0 %v212
  %306 = vmatpush1.bf16.msra.mxu0 %v211
  %307 = vmatprep.subr.bf16.mxu0 0
  %308 = vmatpush1.bf16.msra.mxu0 0
  %309 = vmatprep.subr.bf16.mxu0 0
  %310 = vmatpush1.bf16.msra.mxu0 0
  %311 = vmatprep.subr.bf16.mxu0 0
  %312 = vmatpush1.bf16.msra.mxu0 0
  %313 = vmatprep.subr.bf16.mxu0 0
  %314 = vmatpush1.bf16.msra.mxu0 0
  %315 = vmatprep.subr.bf16.mxu0 0
  %316 = vmatpush1.bf16.msra.mxu0 0
  %317 = vmatprep.subr.bf16.mxu0 0
  %318 = vmatpush1.bf16.msra.mxu0 0
  %319 = vmatprep.subr.bf16.mxu0 0
  %320 = vmatpush1.bf16.msra.mxu0 0
  %321 = vmatprep.subr.bf16.mxu0 0
  %322 = vmatpush1.bf16.msra.mxu0 0
  %323 = vmatprep.subr.bf16.mxu0 0
  %324 = vmatpush1.bf16.msra.mxu0 0
  %325 = vmatprep.subr.bf16.mxu0 0
  %326 = vmatpush1.bf16.msra.mxu0 0
  %327 = vmatprep.subr.bf16.mxu0 0
  %328 = vmatpush1.bf16.msra.mxu0 0
  %329 = vmatprep.subr.bf16.mxu0 0
  %330 = vmatpush1.bf16.msra.mxu0 0
  %331 = vmatprep.mubr.bf16.mxu0 0
  %332 = vmatmul.mubr.bf16.gmra.mrb[0].mxu0 %v297
  %v333 = vpop.f32.mrb[0].mxu0
  %v334 = vadd.f32 %v174, %v333
  %v335 = vpop.f32.mrb[0].mxu0
  %v336 = vadd.f32 %v178, %v335
  %v337 = vpop.f32.mrb[0].mxu0
  %v338 = vpop.f32.mrb[0].mxu0
  %339 = vdwg.mxu0
  %v340 = vadd.f32 %v334, %v119
  %v341 = vxor.u32 %v340, 2147483648
  %v342 = vmul.f32 %v341, 1.442695
  %v343 = vpow.pop %v342
  %v344 = vadd.f32 %v343, 1.0
  %v345 = vrcp.pop %v344
  %v346 = vmul.f32 1.0, %v345
  %v347 = vtanh.pop %v340
  %v348 = vmul.f32 %v346, %v283
  %350 = vrot.lane.b32.xlu0 %v347, 32
  %v351 = vpop.permute.xlu0 %350
  %v353 = vmul.f32 %v346, %v351
  %355 = vrot.lane.b32.xlu0 %v353, 32
  %v356 = vpop.permute.xlu0 %355
  %v358 = vadd.f32 %v348, %v356
  %v359 = vtanh.pop %v358
  %361 = vrot.lane.b32.xlu0 %v359, 32
  %v362 = vpop.permute.xlu0 %361
  %v364 = vmul.f32 %v346, %v362
  %v365 = vxor.u32 %v336, 2147483648
  %v366 = vmul.f32 %v365, 1.442695
  %v367 = vpow.pop %v366
  %v368 = vadd.f32 %v367, 1.0
  %v369 = vrcp.pop %v368
  %v370 = vmul.f32 1.0, %v369
  %v371 = vtanh.pop %v336
  %372 = vrot.lane.b32.xlu0 %v162, 64
  %v373 = vpop.permute.xlu0 %372
  %v375 = vmul.f32 %v370, %v373
  %377 = vrot.lane.b32.xlu0 %v371, 32
  %v378 = vpop.permute.xlu0 %377
  %v380 = vmul.f32 %v370, %v378
  %382 = vrot.lane.b32.xlu0 %v380, 32
  %v383 = vpop.permute.xlu0 %382
  %v385 = vadd.f32 %v375, %v383
  %v386 = vtanh.pop %v385
  %388 = vrot.lane.b32.xlu0 %v386, 32
  %v389 = vpop.permute.xlu0 %388
  %v391 = vmul.f32 %v370, %v389
  %393 = vrot.lane.b32.xlu0 %v364, 64
  %v394 = vpop.permute.xlu0 %393
  %397 = vrot.lane.b32.xlu0 %v391, 96
  %v398 = vpop.permute.xlu0 %397
  %v400 = vsel %vm167, %v394, %v398
  %v401 = vpack.c.bf16 %v400, %v400
  %v403 = vsel %vm221, %v401, 0
  %405 = vmatprep.subr.bf16.mxu0 %v206
  %406 = vmatpush1.bf16.msra.mxu0 %v205
  %407 = vmatprep.subr.bf16.mxu0 %v208
  %408 = vmatpush1.bf16.msra.mxu0 %v207
  %409 = vmatprep.subr.bf16.mxu0 %v210
  %410 = vmatpush1.bf16.msra.mxu0 %v209
  %411 = vmatprep.subr.bf16.mxu0 %v212
  %412 = vmatpush1.bf16.msra.mxu0 %v211
  %413 = vmatprep.subr.bf16.mxu0 0
  %414 = vmatpush1.bf16.msra.mxu0 0
  %415 = vmatprep.subr.bf16.mxu0 0
  %416 = vmatpush1.bf16.msra.mxu0 0
  %417 = vmatprep.subr.bf16.mxu0 0
  %418 = vmatpush1.bf16.msra.mxu0 0
  %419 = vmatprep.subr.bf16.mxu0 0
  %420 = vmatpush1.bf16.msra.mxu0 0
  %421 = vmatprep.subr.bf16.mxu0 0
  %422 = vmatpush1.bf16.msra.mxu0 0
  %423 = vmatprep.subr.bf16.mxu0 0
  %424 = vmatpush1.bf16.msra.mxu0 0
  %425 = vmatprep.subr.bf16.mxu0 0
  %426 = vmatpush1.bf16.msra.mxu0 0
  %427 = vmatprep.subr.bf16.mxu0 0
  %428 = vmatpush1.bf16.msra.mxu0 0
  %429 = vmatprep.subr.bf16.mxu0 0
  %430 = vmatpush1.bf16.msra.mxu0 0
  %431 = vmatprep.subr.bf16.mxu0 0
  %432 = vmatpush1.bf16.msra.mxu0 0
  %433 = vmatprep.subr.bf16.mxu0 0
  %434 = vmatpush1.bf16.msra.mxu0 0
  %435 = vmatprep.subr.bf16.mxu0 0
  %436 = vmatpush1.bf16.msra.mxu0 0
  %437 = vmatprep.mubr.bf16.mxu0 0
  %438 = vmatmul.mubr.bf16.gmra.mrb[0].mxu0 %v403
  %v439 = vpop.f32.mrb[0].mxu0
  %v440 = vadd.f32 %v174, %v439
  %v441 = vpop.f32.mrb[0].mxu0
  %v442 = vadd.f32 %v178, %v441
  %v443 = vpop.f32.mrb[0].mxu0
  %v444 = vpop.f32.mrb[0].mxu0
  %445 = vdwg.mxu0
  %v446 = vadd.f32 %v440, %v125
  %v447 = vxor.u32 %v446, 2147483648
  %v448 = vmul.f32 %v447, 1.442695
  %v449 = vpow.pop %v448
  %v450 = vadd.f32 %v449, 1.0
  %v451 = vrcp.pop %v450
  %v452 = vmul.f32 1.0, %v451
  %v453 = vtanh.pop %v446
  %v454 = vmul.f32 %v452, %v358
  %456 = vrot.lane.b32.xlu0 %v453, 32
  %v457 = vpop.permute.xlu0 %456
  %v459 = vmul.f32 %v452, %v457
  %461 = vrot.lane.b32.xlu0 %v459, 32
  %v462 = vpop.permute.xlu0 %461
  %v464 = vadd.f32 %v454, %v462
  %v465 = vtanh.pop %v464
  %467 = vrot.lane.b32.xlu0 %v465, 32
  %v468 = vpop.permute.xlu0 %467
  %v470 = vmul.f32 %v452, %v468
  %v471 = vxor.u32 %v442, 2147483648
  %v472 = vmul.f32 %v471, 1.442695
  %v473 = vpow.pop %v472
  %v474 = vadd.f32 %v473, 1.0
  %v475 = vrcp.pop %v474
  %v476 = vmul.f32 1.0, %v475
  %v477 = vtanh.pop %v442
  %v478 = vmul.f32 %v476, %v385
  %480 = vrot.lane.b32.xlu0 %v477, 32
  %v481 = vpop.permute.xlu0 %480
  %v483 = vmul.f32 %v476, %v481
  %485 = vrot.lane.b32.xlu0 %v483, 32
  %v486 = vpop.permute.xlu0 %485
  %v488 = vadd.f32 %v478, %v486
  %v489 = vtanh.pop %v488
  %491 = vrot.lane.b32.xlu0 %v489, 32
  %v492 = vpop.permute.xlu0 %491
  %v494 = vmul.f32 %v476, %v492
  %496 = vrot.lane.b32.xlu0 %v470, 64
  %v497 = vpop.permute.xlu0 %496
  %500 = vrot.lane.b32.xlu0 %v494, 96
  %v501 = vpop.permute.xlu0 %500
  %v503 = vsel %vm167, %v497, %v501
  %v504 = vpack.c.bf16 %v503, %v503
  %v506 = vsel %vm221, %v504, 0
  %508 = vmatprep.subr.bf16.mxu0 %v206
  %509 = vmatpush1.bf16.msra.mxu0 %v205
  %510 = vmatprep.subr.bf16.mxu0 %v208
  %511 = vmatpush1.bf16.msra.mxu0 %v207
  %512 = vmatprep.subr.bf16.mxu0 %v210
  %513 = vmatpush1.bf16.msra.mxu0 %v209
  %514 = vmatprep.subr.bf16.mxu0 %v212
  %515 = vmatpush1.bf16.msra.mxu0 %v211
  %516 = vmatprep.subr.bf16.mxu0 0
  %517 = vmatpush1.bf16.msra.mxu0 0
  %518 = vmatprep.subr.bf16.mxu0 0
  %519 = vmatpush1.bf16.msra.mxu0 0
  %520 = vmatprep.subr.bf16.mxu0 0
  %521 = vmatpush1.bf16.msra.mxu0 0
  %522 = vmatprep.subr.bf16.mxu0 0
  %523 = vmatpush1.bf16.msra.mxu0 0
  %524 = vmatprep.subr.bf16.mxu0 0
  %525 = vmatpush1.bf16.msra.mxu0 0
  %526 = vmatprep.subr.bf16.mxu0 0
  %527 = vmatpush1.bf16.msra.mxu0 0
  %528 = vmatprep.subr.bf16.mxu0 0
  %529 = vmatpush1.bf16.msra.mxu0 0
  %530 = vmatprep.subr.bf16.mxu0 0
  %531 = vmatpush1.bf16.msra.mxu0 0
  %532 = vmatprep.subr.bf16.mxu0 0
  %533 = vmatpush1.bf16.msra.mxu0 0
  %534 = vmatprep.subr.bf16.mxu0 0
  %535 = vmatpush1.bf16.msra.mxu0 0
  %536 = vmatprep.subr.bf16.mxu0 0
  %537 = vmatpush1.bf16.msra.mxu0 0
  %538 = vmatprep.subr.bf16.mxu0 0
  %539 = vmatpush1.bf16.msra.mxu0 0
  %540 = vmatprep.mubr.bf16.mxu0 0
  %541 = vmatmul.mubr.bf16.gmra.mrb[0].mxu0 %v506
  %v542 = vpop.f32.mrb[0].mxu0
  %v543 = vadd.f32 %v174, %v542
  %v544 = vpop.f32.mrb[0].mxu0
  %v545 = vadd.f32 %v178, %v544
  %v546 = vpop.f32.mrb[0].mxu0
  %v547 = vpop.f32.mrb[0].mxu0
  %548 = vdwg.mxu0
  %v549 = vadd.f32 %v543, %v129
  %v550 = vxor.u32 %v549, 2147483648
  %v551 = vmul.f32 %v550, 1.442695
  %v552 = vpow.pop %v551
  %v553 = vadd.f32 %v552, 1.0
  %v554 = vrcp.pop %v553
  %v555 = vmul.f32 1.0, %v554
  %v556 = vtanh.pop %v549
  %v557 = vmul.f32 %v555, %v464
  %559 = vrot.lane.b32.xlu0 %v556, 32
  %v560 = vpop.permute.xlu0 %559
  %v562 = vmul.f32 %v555, %v560
  %564 = vrot.lane.b32.xlu0 %v562, 32
  %v565 = vpop.permute.xlu0 %564
  %v567 = vadd.f32 %v557, %v565
  %v568 = vtanh.pop %v567
  %570 = vrot.lane.b32.xlu0 %v568, 32
  %v571 = vpop.permute.xlu0 %570
  %v573 = vmul.f32 %v555, %v571
  %v574 = vxor.u32 %v545, 2147483648
  %v575 = vmul.f32 %v574, 1.442695
  %v576 = vpow.pop %v575
  %v577 = vadd.f32 %v576, 1.0
  %v578 = vrcp.pop %v577
  %v579 = vmul.f32 1.0, %v578
  %v580 = vtanh.pop %v545
  %v581 = vmul.f32 %v579, %v488
  %583 = vrot.lane.b32.xlu0 %v580, 32
  %v584 = vpop.permute.xlu0 %583
  %v586 = vmul.f32 %v579, %v584
  %588 = vrot.lane.b32.xlu0 %v586, 32
  %v589 = vpop.permute.xlu0 %588
  %v591 = vadd.f32 %v581, %v589
  %v592 = vtanh.pop %v591
  %594 = vrot.lane.b32.xlu0 %v592, 32
  %v595 = vpop.permute.xlu0 %594
  %v597 = vmul.f32 %v579, %v595
  %599 = vrot.lane.b32.xlu0 %v573, 64
  %v600 = vpop.permute.xlu0 %599
  %603 = vrot.lane.b32.xlu0 %v597, 96
  %v604 = vpop.permute.xlu0 %603
  %v606 = vsel %vm167, %v600, %v604
  %v607 = vpack.c.bf16 %v606, %v606
  %v609 = vsel %vm221, %v607, 0
  %611 = vmatprep.subr.bf16.mxu0 %v206
  %612 = vmatpush1.bf16.msra.mxu0 %v205
  %613 = vmatprep.subr.bf16.mxu0 %v208
  %614 = vmatpush1.bf16.msra.mxu0 %v207
  %615 = vmatprep.subr.bf16.mxu0 %v210
  %616 = vmatpush1.bf16.msra.mxu0 %v209
  %617 = vmatprep.subr.bf16.mxu0 %v212
  %618 = vmatpush1.bf16.msra.mxu0 %v211
  %619 = vmatprep.subr.bf16.mxu0 0
  %620 = vmatpush1.bf16.msra.mxu0 0
  %621 = vmatprep.subr.bf16.mxu0 0
  %622 = vmatpush1.bf16.msra.mxu0 0
  %623 = vmatprep.subr.bf16.mxu0 0
  %624 = vmatpush1.bf16.msra.mxu0 0
  %625 = vmatprep.subr.bf16.mxu0 0
  %626 = vmatpush1.bf16.msra.mxu0 0
  %627 = vmatprep.subr.bf16.mxu0 0
  %628 = vmatpush1.bf16.msra.mxu0 0
  %629 = vmatprep.subr.bf16.mxu0 0
  %630 = vmatpush1.bf16.msra.mxu0 0
  %631 = vmatprep.subr.bf16.mxu0 0
  %632 = vmatpush1.bf16.msra.mxu0 0
  %633 = vmatprep.subr.bf16.mxu0 0
  %634 = vmatpush1.bf16.msra.mxu0 0
  %635 = vmatprep.subr.bf16.mxu0 0
  %636 = vmatpush1.bf16.msra.mxu0 0
  %637 = vmatprep.subr.bf16.mxu0 0
  %638 = vmatpush1.bf16.msra.mxu0 0
  %639 = vmatprep.subr.bf16.mxu0 0
  %640 = vmatpush1.bf16.msra.mxu0 0
  %641 = vmatprep.subr.bf16.mxu0 0
  %642 = vmatpush1.bf16.msra.mxu0 0
  %643 = vmatprep.mubr.bf16.mxu0 0
  %644 = vmatmul.mubr.bf16.gmra.mrb[0].mxu0 %v609
  %v645 = vpop.f32.mrb[0].mxu0
  %v646 = vadd.f32 %v174, %v645
  %v647 = vpop.f32.mrb[0].mxu0
  %v648 = vadd.f32 %v178, %v647
  %v649 = vpop.f32.mrb[0].mxu0
  %v650 = vpop.f32.mrb[0].mxu0
  %651 = vdwg.mxu0
  %v652 = vadd.f32 %v646, %v135
  %v653 = vxor.u32 %v652, 2147483648
  %v654 = vmul.f32 %v653, 1.442695
  %v655 = vpow.pop %v654
  %v656 = vadd.f32 %v655, 1.0
  %v657 = vrcp.pop %v656
  %v658 = vmul.f32 1.0, %v657
  %v659 = vtanh.pop %v652
  %v660 = vmul.f32 %v658, %v567
  %662 = vrot.lane.b32.xlu0 %v659, 32
  %v663 = vpop.permute.xlu0 %662
  %v665 = vmul.f32 %v658, %v663
  %667 = vrot.lane.b32.xlu0 %v665, 32
  %v668 = vpop.permute.xlu0 %667
  %v670 = vadd.f32 %v660, %v668
  %v671 = vtanh.pop %v670
  %673 = vrot.lane.b32.xlu0 %v671, 32
  %v674 = vpop.permute.xlu0 %673
  %v676 = vmul.f32 %v658, %v674
  %v677 = vxor.u32 %v648, 2147483648
  %v678 = vmul.f32 %v677, 1.442695
  %v679 = vpow.pop %v678
  %v680 = vadd.f32 %v679, 1.0
  %v681 = vrcp.pop %v680
  %v682 = vmul.f32 1.0, %v681
  %v683 = vtanh.pop %v648
  %v684 = vmul.f32 %v682, %v591
  %686 = vrot.lane.b32.xlu0 %v683, 32
  %v687 = vpop.permute.xlu0 %686
  %v689 = vmul.f32 %v682, %v687
  %691 = vrot.lane.b32.xlu0 %v689, 32
  %v692 = vpop.permute.xlu0 %691
  %v694 = vadd.f32 %v684, %v692
  %v695 = vtanh.pop %v694
  %697 = vrot.lane.b32.xlu0 %v695, 32
  %v698 = vpop.permute.xlu0 %697
  %v700 = vmul.f32 %v682, %v698
  %702 = vrot.lane.b32.xlu0 %v676, 64
  %v703 = vpop.permute.xlu0 %702
  %706 = vrot.lane.b32.xlu0 %v700, 96
  %v707 = vpop.permute.xlu0 %706
  %v709 = vsel %vm167, %v703, %v707
  %v710 = vpack.c.bf16 %v709, %v709
  %v712 = vsel %vm221, %v710, 0
  %714 = vmatprep.subr.bf16.mxu0 %v206
  %715 = vmatpush1.bf16.msra.mxu0 %v205
  %716 = vmatprep.subr.bf16.mxu0 %v208
  %717 = vmatpush1.bf16.msra.mxu0 %v207
  %718 = vmatprep.subr.bf16.mxu0 %v210
  %719 = vmatpush1.bf16.msra.mxu0 %v209
  %720 = vmatprep.subr.bf16.mxu0 %v212
  %721 = vmatpush1.bf16.msra.mxu0 %v211
  %722 = vmatprep.subr.bf16.mxu0 0
  %723 = vmatpush1.bf16.msra.mxu0 0
  %724 = vmatprep.subr.bf16.mxu0 0
  %725 = vmatpush1.bf16.msra.mxu0 0
  %726 = vmatprep.subr.bf16.mxu0 0
  %727 = vmatpush1.bf16.msra.mxu0 0
  %728 = vmatprep.subr.bf16.mxu0 0
  %729 = vmatpush1.bf16.msra.mxu0 0
  %730 = vmatprep.subr.bf16.mxu0 0
  %731 = vmatpush1.bf16.msra.mxu0 0
  %732 = vmatprep.subr.bf16.mxu0 0
  %733 = vmatpush1.bf16.msra.mxu0 0
  %734 = vmatprep.subr.bf16.mxu0 0
  %735 = vmatpush1.bf16.msra.mxu0 0
  %736 = vmatprep.subr.bf16.mxu0 0
  %737 = vmatpush1.bf16.msra.mxu0 0
  %738 = vmatprep.subr.bf16.mxu0 0
  %739 = vmatpush1.bf16.msra.mxu0 0
  %740 = vmatprep.subr.bf16.mxu0 0
  %741 = vmatpush1.bf16.msra.mxu0 0
  %742 = vmatprep.subr.bf16.mxu0 0
  %743 = vmatpush1.bf16.msra.mxu0 0
  %744 = vmatprep.subr.bf16.mxu0 0
  %745 = vmatpush1.bf16.msra.mxu0 0
  %746 = vmatprep.mubr.bf16.mxu0 0
  %747 = vmatmul.mubr.bf16.gmra.mrb[0].mxu0 %v712
  %v748 = vpop.f32.mrb[0].mxu0
  %v749 = vadd.f32 %v174, %v748
  %v750 = vpop.f32.mrb[0].mxu0
  %v751 = vadd.f32 %v178, %v750
  %v752 = vpop.f32.mrb[0].mxu0
  %v753 = vpop.f32.mrb[0].mxu0
  %754 = vdwg.mxu0
  %v755 = vadd.f32 %v749, %v139
  %v756 = vxor.u32 %v755, 2147483648
  %v757 = vmul.f32 %v756, 1.442695
  %v758 = vpow.pop %v757
  %v759 = vadd.f32 %v758, 1.0
  %v760 = vrcp.pop %v759
  %v761 = vmul.f32 1.0, %v760
  %v762 = vtanh.pop %v755
  %v763 = vmul.f32 %v761, %v670
  %765 = vrot.lane.b32.xlu0 %v762, 32
  %v766 = vpop.permute.xlu0 %765
  %v768 = vmul.f32 %v761, %v766
  %770 = vrot.lane.b32.xlu0 %v768, 32
  %v771 = vpop.permute.xlu0 %770
  %v773 = vadd.f32 %v763, %v771
  %v774 = vtanh.pop %v773
  %776 = vrot.lane.b32.xlu0 %v774, 32
  %v777 = vpop.permute.xlu0 %776
  %v779 = vmul.f32 %v761, %v777
  %v780 = vxor.u32 %v751, 2147483648
  %v781 = vmul.f32 %v780, 1.442695
  %v782 = vpow.pop %v781
  %v783 = vadd.f32 %v782, 1.0
  %v784 = vrcp.pop %v783
  %v785 = vmul.f32 1.0, %v784
  %v786 = vtanh.pop %v751
  %v787 = vmul.f32 %v785, %v694
  %789 = vrot.lane.b32.xlu0 %v786, 32
  %v790 = vpop.permute.xlu0 %789
  %v792 = vmul.f32 %v785, %v790
  %794 = vrot.lane.b32.xlu0 %v792, 32
  %v795 = vpop.permute.xlu0 %794
  %v797 = vadd.f32 %v787, %v795
  %v798 = vtanh.pop %v797
  %800 = vrot.lane.b32.xlu0 %v798, 32
  %v801 = vpop.permute.xlu0 %800
  %v803 = vmul.f32 %v785, %v801
  %805 = vrot.lane.b32.xlu0 %v779, 64
  %v806 = vpop.permute.xlu0 %805
  %809 = vrot.lane.b32.xlu0 %v803, 96
  %v810 = vpop.permute.xlu0 %809
  %v812 = vsel %vm167, %v806, %v810
  %v813 = vpack.c.bf16 %v812, %v812
  %v815 = vsel %vm221, %v813, 0
  %817 = vmatprep.subr.bf16.mxu0 %v206
  %818 = vmatpush1.bf16.msra.mxu0 %v205
  %819 = vmatprep.subr.bf16.mxu0 %v208
  %820 = vmatpush1.bf16.msra.mxu0 %v207
  %821 = vmatprep.subr.bf16.mxu0 %v210
  %822 = vmatpush1.bf16.msra.mxu0 %v209
  %823 = vmatprep.subr.bf16.mxu0 %v212
  %824 = vmatpush1.bf16.msra.mxu0 %v211
  %825 = vmatprep.subr.bf16.mxu0 0
  %826 = vmatpush1.bf16.msra.mxu0 0
  %827 = vmatprep.subr.bf16.mxu0 0
  %828 = vmatpush1.bf16.msra.mxu0 0
  %829 = vmatprep.subr.bf16.mxu0 0
  %830 = vmatpush1.bf16.msra.mxu0 0
  %831 = vmatprep.subr.bf16.mxu0 0
  %832 = vmatpush1.bf16.msra.mxu0 0
  %833 = vmatprep.subr.bf16.mxu0 0
  %834 = vmatpush1.bf16.msra.mxu0 0
  %835 = vmatprep.subr.bf16.mxu0 0
  %836 = vmatpush1.bf16.msra.mxu0 0
  %837 = vmatprep.subr.bf16.mxu0 0
  %838 = vmatpush1.bf16.msra.mxu0 0
  %839 = vmatprep.subr.bf16.mxu0 0
  %840 = vmatpush1.bf16.msra.mxu0 0
  %841 = vmatprep.subr.bf16.mxu0 0
  %842 = vmatpush1.bf16.msra.mxu0 0
  %843 = vmatprep.subr.bf16.mxu0 0
  %844 = vmatpush1.bf16.msra.mxu0 0
  %845 = vmatprep.subr.bf16.mxu0 0
  %846 = vmatpush1.bf16.msra.mxu0 0
  %847 = vmatprep.subr.bf16.mxu0 0
  %848 = vmatpush1.bf16.msra.mxu0 0
  %849 = vmatprep.mubr.bf16.mxu0 0
  %850 = vmatmul.mubr.bf16.gmra.mrb[0].mxu0 %v815
  %v851 = vpop.f32.mrb[0].mxu0
  %v852 = vadd.f32 %v174, %v851
  %v853 = vpop.f32.mrb[0].mxu0
  %v854 = vadd.f32 %v178, %v853
  %v855 = vpop.f32.mrb[0].mxu0
  %v856 = vpop.f32.mrb[0].mxu0
  %857 = vdwg.mxu0
  %v858 = vadd.f32 %v852, %v145
  %v859 = vxor.u32 %v858, 2147483648
  %v860 = vmul.f32 %v859, 1.442695
  %v861 = vpow.pop %v860
  %v862 = vadd.f32 %v861, 1.0
  %v863 = vrcp.pop %v862
  %v864 = vmul.f32 1.0, %v863
  %v865 = vtanh.pop %v858
  %v866 = vmul.f32 %v864, %v773
  %868 = vrot.lane.b32.xlu0 %v865, 32
  %v869 = vpop.permute.xlu0 %868
  %v871 = vmul.f32 %v864, %v869
  %873 = vrot.lane.b32.xlu0 %v871, 32
  %v874 = vpop.permute.xlu0 %873
  %v876 = vadd.f32 %v866, %v874
  %v877 = vtanh.pop %v876
  %879 = vrot.lane.b32.xlu0 %v877, 32
  %v880 = vpop.permute.xlu0 %879
  %v882 = vmul.f32 %v864, %v880
  %v883 = vxor.u32 %v854, 2147483648
  %v884 = vmul.f32 %v883, 1.442695
  %v885 = vpow.pop %v884
  %v886 = vadd.f32 %v885, 1.0
  %v887 = vrcp.pop %v886
  %v888 = vmul.f32 1.0, %v887
  %v889 = vtanh.pop %v854
  %v890 = vmul.f32 %v888, %v797
  %892 = vrot.lane.b32.xlu0 %v889, 32
  %v893 = vpop.permute.xlu0 %892
  %v895 = vmul.f32 %v888, %v893
  %897 = vrot.lane.b32.xlu0 %v895, 32
  %v898 = vpop.permute.xlu0 %897
  %v900 = vadd.f32 %v890, %v898
  %v901 = vtanh.pop %v900
  %903 = vrot.lane.b32.xlu0 %v901, 32
  %v904 = vpop.permute.xlu0 %903
  %v906 = vmul.f32 %v888, %v904
  %908 = vrot.lane.b32.xlu0 %v882, 64
  %v909 = vpop.permute.xlu0 %908
  %912 = vrot.lane.b32.xlu0 %v906, 96
  %v913 = vpop.permute.xlu0 %912
  %v915 = vsel %vm167, %v909, %v913
  %v916 = vpack.c.bf16 %v915, %v915
  %v918 = vsel %vm221, %v916, 0
  %920 = vmatprep.subr.bf16.mxu0 %v206
  %921 = vmatpush1.bf16.msra.mxu0 %v205
  %922 = vmatprep.subr.bf16.mxu0 %v208
  %923 = vmatpush1.bf16.msra.mxu0 %v207
  %924 = vmatprep.subr.bf16.mxu0 %v210
  %925 = vmatpush1.bf16.msra.mxu0 %v209
  %926 = vmatprep.subr.bf16.mxu0 %v212
  %927 = vmatpush1.bf16.msra.mxu0 %v211
  %928 = vmatprep.subr.bf16.mxu0 0
  %929 = vmatpush1.bf16.msra.mxu0 0
  %930 = vmatprep.subr.bf16.mxu0 0
  %931 = vmatpush1.bf16.msra.mxu0 0
  %932 = vmatprep.subr.bf16.mxu0 0
  %933 = vmatpush1.bf16.msra.mxu0 0
  %934 = vmatprep.subr.bf16.mxu0 0
  %935 = vmatpush1.bf16.msra.mxu0 0
  %936 = vmatprep.subr.bf16.mxu0 0
  %937 = vmatpush1.bf16.msra.mxu0 0
  %938 = vmatprep.subr.bf16.mxu0 0
  %939 = vmatpush1.bf16.msra.mxu0 0
  %940 = vmatprep.subr.bf16.mxu0 0
  %941 = vmatpush1.bf16.msra.mxu0 0
  %942 = vmatprep.subr.bf16.mxu0 0
  %943 = vmatpush1.bf16.msra.mxu0 0
  %944 = vmatprep.subr.bf16.mxu0 0
  %945 = vmatpush1.bf16.msra.mxu0 0
  %946 = vmatprep.subr.bf16.mxu0 0
  %947 = vmatpush1.bf16.msra.mxu0 0
  %948 = vmatprep.subr.bf16.mxu0 0
  %949 = vmatpush1.bf16.msra.mxu0 0
  %950 = vmatprep.subr.bf16.mxu0 0
  %951 = vmatpush1.bf16.msra.mxu0 0
  %952 = vmatprep.mubr.bf16.mxu0 0
  %953 = vmatmul.mubr.bf16.gmra.mrb[0].mxu0 %v918
  %v954 = vpop.f32.mrb[0].mxu0
  %v955 = vadd.f32 %v174, %v954
  %v956 = vpop.f32.mrb[0].mxu0
  %v957 = vadd.f32 %v178, %v956
  %v958 = vpop.f32.mrb[0].mxu0
  %v959 = vpop.f32.mrb[0].mxu0
  %960 = vdwg.mxu0
  %v961 = vadd.f32 %v955, %v149
  %v962 = vxor.u32 %v961, 2147483648
  %v963 = vmul.f32 %v962, 1.442695
  %v964 = vpow.pop %v963
  %v965 = vadd.f32 %v964, 1.0
  %v966 = vrcp.pop %v965
  %v967 = vmul.f32 1.0, %v966
  %v968 = vtanh.pop %v961
  %v969 = vmul.f32 %v967, %v876
  %971 = vrot.lane.b32.xlu0 %v968, 32
  %v972 = vpop.permute.xlu0 %971
  %v974 = vmul.f32 %v967, %v972
  %976 = vrot.lane.b32.xlu0 %v974, 32
  %v977 = vpop.permute.xlu0 %976
  %v979 = vadd.f32 %v969, %v977
  %v980 = vtanh.pop %v979
  %982 = vrot.lane.b32.xlu0 %v980, 32
  %v983 = vpop.permute.xlu0 %982
  %v985 = vmul.f32 %v967, %v983
  %v986 = vxor.u32 %v957, 2147483648
  %v987 = vmul.f32 %v986, 1.442695
  %v988 = vpow.pop %v987
  %v989 = vadd.f32 %v988, 1.0
  %v990 = vrcp.pop %v989
  %v991 = vmul.f32 1.0, %v990
  %v992 = vtanh.pop %v957
  %v993 = vmul.f32 %v991, %v900
  %995 = vrot.lane.b32.xlu0 %v992, 32
  %v996 = vpop.permute.xlu0 %995
  %v998 = vmul.f32 %v991, %v996
  %1000 = vrot.lane.b32.xlu0 %v998, 32
  %v1001 = vpop.permute.xlu0 %1000
  %v1003 = vadd.f32 %v993, %v1001
  %v1004 = vtanh.pop %v1003
  %1006 = vrot.lane.b32.xlu0 %v1004, 32
  %v1007 = vpop.permute.xlu0 %1006
  %v1009 = vmul.f32 %v991, %v1007
  %1011 = vrot.lane.b32.xlu0 %v985, 64
  %v1012 = vpop.permute.xlu0 %1011
  %1015 = vrot.lane.b32.xlu0 %v1009, 96
  %v1016 = vpop.permute.xlu0 %1015
  %v1018 = vsel %vm167, %v1012, %v1016
  %v1019 = vpack.c.bf16 %v1018, %v1018
  %v1021 = vsel %vm221, %v1019, 0
  %1023 = vmatprep.subr.bf16.mxu0 %v206
  %1024 = vmatpush1.bf16.msra.mxu0 %v205
  %1025 = vmatprep.subr.bf16.mxu0 %v208
  %1026 = vmatpush1.bf16.msra.mxu0 %v207
  %1027 = vmatprep.subr.bf16.mxu0 %v210
  %1028 = vmatpush1.bf16.msra.mxu0 %v209
  %1029 = vmatprep.subr.bf16.mxu0 %v212
  %1030 = vmatpush1.bf16.msra.mxu0 %v211
  %1031 = vmatprep.subr.bf16.mxu0 0
  %1032 = vmatpush1.bf16.msra.mxu0 0
  %1033 = vmatprep.subr.bf16.mxu0 0
  %1034 = vmatpush1.bf16.msra.mxu0 0
  %1035 = vmatprep.subr.bf16.mxu0 0
  %1036 = vmatpush1.bf16.msra.mxu0 0
  %1037 = vmatprep.subr.bf16.mxu0 0
  %1038 = vmatpush1.bf16.msra.mxu0 0
  %1039 = vmatprep.subr.bf16.mxu0 0
  %1040 = vmatpush1.bf16.msra.mxu0 0
  %1041 = vmatprep.subr.bf16.mxu0 0
  %1042 = vmatpush1.bf16.msra.mxu0 0
  %1043 = vmatprep.subr.bf16.mxu0 0
  %1044 = vmatpush1.bf16.msra.mxu0 0
  %1045 = vmatprep.subr.bf16.mxu0 0
  %1046 = vmatpush1.bf16.msra.mxu0 0
  %1047 = vmatprep.subr.bf16.mxu0 0
  %1048 = vmatpush1.bf16.msra.mxu0 0
  %1049 = vmatprep.subr.bf16.mxu0 0
  %1050 = vmatpush1.bf16.msra.mxu0 0
  %1051 = vmatprep.subr.bf16.mxu0 0
  %1052 = vmatpush1.bf16.msra.mxu0 0
  %1053 = vmatprep.subr.bf16.mxu0 0
  %1054 = vmatpush1.bf16.msra.mxu0 0
  %1055 = vmatprep.mubr.bf16.mxu0 0
  %1056 = vmatmul.mubr.bf16.gmra.mrb[0].mxu0 %v1021
  %v1057 = vpop.f32.mrb[0].mxu0
  %v1058 = vpop.f32.mrb[0].mxu0
  %v1059 = vadd.f32 %v178, %v1058
  %v1060 = vpop.f32.mrb[0].mxu0
  %v1061 = vpop.f32.mrb[0].mxu0
  %1062 = vdwg.mxu0
  %v1063 = vxor.u32 %v1059, 2147483648
  %v1064 = vmul.f32 %v1063, 1.442695
  %v1065 = vpow.pop %v1064
  %v1066 = vadd.f32 %v1065, 1.0
  %v1067 = vrcp.pop %v1066
  %v1068 = vmul.f32 1.0, %v1067
  %v1069 = vtanh.pop %v1059
  %v1070 = vmul.f32 %v1068, %v1003
  %1072 = vrot.lane.b32.xlu0 %v1069, 32
  %v1073 = vpop.permute.xlu0 %1072
  %v1075 = vmul.f32 %v1068, %v1073
  %1077 = vrot.lane.b32.xlu0 %v1075, 32
  %v1078 = vpop.permute.xlu0 %1077
  %v1080 = vadd.f32 %v1070, %v1078
  %v1081 = vtanh.pop %v1080
  %1083 = vrot.lane.b32.xlu0 %v1081, 32
  %v1084 = vpop.permute.xlu0 %1083
  %v1086 = vmul.f32 %v1068, %v1084
  %1088 = vrot.lane.b32.xlu0 %v1080, 64
  %v1089 = vpop.permute.xlu0 %1088
  %v1091 = vsel %vm167, %v1012, %v979
  %v1092 = vsel %vm221, %v1091, %v1086
  %vm1093 = vcmask 785408
  %v1094 = vsel %vm1093, %v1092, %v1089
  %1095 = vst [vmem:[%s11] sm:$0xff] %v1094
  %v1096 = vpack.c.bf16 %v494, %v391
  %v1097 = vpack.c.bf16 %v700, %v597
  %v1098 = vpack.c.bf16 %v906, %v803
  %v1099 = vpack.c.bf16 %v1086, %v1009
  %v1100 = vld [vmem:[%s4] sm:$0xf]
  %v1101 = vld [vmem:[%s4 + $0x4] sm:$0xf]
  %v1102 = vld [vmem:[%s4 + $0x8] sm:$0xf]
  %v1103 = vld [vmem:[%s4 + $0xc] sm:$0xf]
  %v1104 = vld [vmem:[%s5] sm:$0x1]
  %v1106 = vlaneseq
  %v1107 = vshrl.u32 %v1106, 7
  %v1108 = vsub.s32 0, %v1107
  %v1109 = vrot.slane %v1104, %v1108
  %1115 = vrot.lane.b32.xlu0 %v1096, 64
  %v1116 = vpop.permute.xlu0 %1115
  %1117 = vrot.lane.b32.xlu0 %v1097, 64
  %v1118 = vpop.permute.xlu0 %1117
  %1119 = vrot.lane.b32.xlu0 %v1098, 64
  %v1120 = vpop.permute.xlu0 %1119
  %1121 = vrot.lane.b32.xlu0 %v1099, 64
  %v1122 = vpop.permute.xlu0 %1121
  %v1127 = vunpack.c.l.b16 %v1100
  %v1128 = vunpack.c.l.b16 %v1101
  %v1129 = vunpack.c.l.b16 %v1102
  %v1130 = vunpack.c.l.b16 %v1103
  %v1131 = vpack.c.b16 %v1128, %v1127
  %v1132 = vpack.c.b16 %v1130, %v1129
  %v1136 = vsel %vm167, %v1116, 0
  %v1139 = vsel %vm167, %v1118, 0
  %v1142 = vsel %vm167, %v1120, 0
  %v1145 = vsel %vm167, %v1122, 0
  %1147 = vmatprep.subr.bf16.mxu0 0
  %1148 = vmatpush1.bf16.msra.mxu0 %v1131
  %1149 = vmatprep.subr.bf16.mxu0 0
  %1150 = vmatpush1.bf16.msra.mxu0 %v1132
  %1151 = vmatprep.subr.bf16.mxu0 0
  %1152 = vmatpush1.bf16.msra.mxu0 0
  %1153 = vmatprep.subr.bf16.mxu0 0
  %1154 = vmatpush1.bf16.msra.mxu0 0
  %1155 = vmatprep.subr.bf16.mxu0 0
  %1156 = vmatpush1.bf16.msra.mxu0 0
  %1157 = vmatprep.subr.bf16.mxu0 0
  %1158 = vmatpush1.bf16.msra.mxu0 0
  %1159 = vmatprep.subr.bf16.mxu0 0
  %1160 = vmatpush1.bf16.msra.mxu0 0
  %1161 = vmatprep.subr.bf16.mxu0 0
  %1162 = vmatpush1.bf16.msra.mxu0 0
  %1163 = vmatprep.subr.bf16.mxu0 0
  %1164 = vmatpush1.bf16.msra.mxu0 0
  %1165 = vmatprep.subr.bf16.mxu0 0
  %1166 = vmatpush1.bf16.msra.mxu0 0
  %1167 = vmatprep.subr.bf16.mxu0 0
  %1168 = vmatpush1.bf16.msra.mxu0 0
  %1169 = vmatprep.subr.bf16.mxu0 0
  %1170 = vmatpush1.bf16.msra.mxu0 0
  %1171 = vmatprep.subr.bf16.mxu0 0
  %1172 = vmatpush1.bf16.msra.mxu0 0
  %1173 = vmatprep.subr.bf16.mxu0 0
  %1174 = vmatpush1.bf16.msra.mxu0 0
  %1175 = vmatprep.subr.bf16.mxu0 0
  %1176 = vmatpush1.bf16.msra.mxu0 0
  %1177 = vmatprep.subr.bf16.mxu0 0
  %1178 = vmatpush1.bf16.msra.mxu0 0
  %1179 = vmatprep.mubr.bf16.mxu0 0
  %1180 = vmatmul.mubr.bf16.gmra.mrb[0].mxu0 %v1136
  %v1181 = vpop.f32.mrb[0].mxu0
  %v1182 = vadd.f32 %v1109, %v1181
  %v1183 = vpop.f32.mrb[0].mxu0
  %v1184 = vpop.f32.mrb[0].mxu0
  %v1185 = vadd.f32 %v1109, %v1184
  %v1186 = vpop.f32.mrb[0].mxu0
  %1187 = vmatprep.mubr.bf16.mxu0 0
  %1188 = vmatmul.mubr.bf16.gmra.mrb[0].mxu0 %v1139
  %v1189 = vpop.f32.mrb[0].mxu0
  %v1190 = vadd.f32 %v1109, %v1189
  %v1191 = vpop.f32.mrb[0].mxu0
  %v1192 = vpop.f32.mrb[0].mxu0
  %v1193 = vadd.f32 %v1109, %v1192
  %v1194 = vpop.f32.mrb[0].mxu0
  %1195 = vmatprep.mubr.bf16.mxu0 0
  %1196 = vmatmul.mubr.bf16.gmra.mrb[0].mxu0 %v1142
  %v1197 = vpop.f32.mrb[0].mxu0
  %v1198 = vadd.f32 %v1109, %v1197
  %v1199 = vpop.f32.mrb[0].mxu0
  %v1200 = vpop.f32.mrb[0].mxu0
  %v1201 = vadd.f32 %v1109, %v1200
  %v1202 = vpop.f32.mrb[0].mxu0
  %1203 = vmatprep.mubr.bf16.mxu0 0
  %1204 = vmatmul.mubr.bf16.gmra.mrb[0].mxu0 %v1145
  %v1205 = vpop.f32.mrb[0].mxu0
  %v1206 = vadd.f32 %v1109, %v1205
  %v1207 = vpop.f32.mrb[0].mxu0
  %v1208 = vpop.f32.mrb[0].mxu0
  %v1209 = vadd.f32 %v1109, %v1208
  %v1210 = vpop.f32.mrb[0].mxu0
  %1211 = vdwg.mxu0
  %v1212 = vld [vmem:[%s7 + $0x20] sm:$0xf]
  %v1213 = vld [vmem:[%s7 + $0x24] sm:$0xf]
  %v1214 = vld [vmem:[%s7 + $0x28] sm:$0xf]
  %v1215 = vld [vmem:[%s7 + $0x2c] sm:$0xf]
  %1224 = vrot.lane.b32.xlu0 %v117, 64
  %v1225 = vpop.permute.xlu0 %1224
  %1226 = vrot.lane.b32.xlu0 %v121, 64
  %v1227 = vpop.permute.xlu0 %1226
  %1228 = vrot.lane.b32.xlu0 %v127, 64
  %v1229 = vpop.permute.xlu0 %1228
  %1230 = vrot.lane.b32.xlu0 %v131, 64
  %v1231 = vpop.permute.xlu0 %1230
  %1232 = vrot.lane.b32.xlu0 %v137, 64
  %v1233 = vpop.permute.xlu0 %1232
  %1234 = vrot.lane.b32.xlu0 %v141, 64
  %v1235 = vpop.permute.xlu0 %1234
  %1236 = vrot.lane.b32.xlu0 %v147, 64
  %v1237 = vpop.permute.xlu0 %1236
  %1238 = vrot.lane.b32.xlu0 %v151, 64
  %v1239 = vpop.permute.xlu0 %1238
  %v1248 = vmul.f32 %v1182, %v1225
  %v1249 = vmul.f32 %v1185, %v1227
  %v1250 = vmul.f32 %v1190, %v1229
  %v1251 = vmul.f32 %v1193, %v1231
  %v1252 = vmul.f32 %v1198, %v1233
  %v1253 = vmul.f32 %v1201, %v1235
  %v1254 = vmul.f32 %v1206, %v1237
  %v1255 = vmul.f32 %v1209, %v1239
  %v1256 = vpack.c.bf16 %v1249, %v1248
  %v1257 = vpack.c.bf16 %v1251, %v1250
  %v1258 = vpack.c.bf16 %v1253, %v1252
  %v1259 = vpack.c.bf16 %v1255, %v1254
  %1264 = vrot.lane.b32.xlu0 %v1256, 64
  %v1265 = vpop.permute.xlu0 %1264
  %1266 = vrot.lane.b32.xlu0 %v1257, 64
  %v1267 = vpop.permute.xlu0 %1266
  %1268 = vrot.lane.b32.xlu0 %v1258, 64
  %v1269 = vpop.permute.xlu0 %1268
  %1270 = vrot.lane.b32.xlu0 %v1259, 64
  %v1271 = vpop.permute.xlu0 %1270
  %v1276 = vunpack.c.l.b16 %v1212
  %v1277 = vunpack.c.l.b16 %v1213
  %v1278 = vunpack.c.l.b16 %v1214
  %v1279 = vunpack.c.l.b16 %v1215
  %v1280 = vpack.c.b16 %v1277, %v1276
  %v1281 = vpack.c.b16 %v1279, %v1278
  %v1285 = vsel %vm167, %v1265, 0
  %v1288 = vsel %vm167, %v1267, 0
  %v1291 = vsel %vm167, %v1269, 0
  %v1294 = vsel %vm167, %v1271, 0
  %1296 = vmatprep.subr.bf16.mxu0 0
  %1297 = vmatpush1.bf16.msra.mxu0 %v1280
  %1298 = vmatprep.subr.bf16.mxu0 0
  %1299 = vmatpush1.bf16.msra.mxu0 %v1281
  %1300 = vmatprep.subr.bf16.mxu0 0
  %1301 = vmatpush1.bf16.msra.mxu0 0
  %1302 = vmatprep.subr.bf16.mxu0 0
  %1303 = vmatpush1.bf16.msra.mxu0 0
  %1304 = vmatprep.subr.bf16.mxu0 0
  %1305 = vmatpush1.bf16.msra.mxu0 0
  %1306 = vmatprep.subr.bf16.mxu0 0
  %1307 = vmatpush1.bf16.msra.mxu0 0
  %1308 = vmatprep.subr.bf16.mxu0 0
  %1309 = vmatpush1.bf16.msra.mxu0 0
  %1310 = vmatprep.subr.bf16.mxu0 0
  %1311 = vmatpush1.bf16.msra.mxu0 0
  %1312 = vmatprep.subr.bf16.mxu0 0
  %1313 = vmatpush1.bf16.msra.mxu0 0
  %1314 = vmatprep.subr.bf16.mxu0 0
  %1315 = vmatpush1.bf16.msra.mxu0 0
  %1316 = vmatprep.subr.bf16.mxu0 0
  %1317 = vmatpush1.bf16.msra.mxu0 0
  %1318 = vmatprep.subr.bf16.mxu0 0
  %1319 = vmatpush1.bf16.msra.mxu0 0
  %1320 = vmatprep.subr.bf16.mxu0 0
  %1321 = vmatpush1.bf16.msra.mxu0 0
  %1322 = vmatprep.subr.bf16.mxu0 0
  %1323 = vmatpush1.bf16.msra.mxu0 0
  %1324 = vmatprep.subr.bf16.mxu0 0
  %1325 = vmatpush1.bf16.msra.mxu0 0
  %1326 = vmatprep.subr.bf16.mxu0 0
  %1327 = vmatpush1.bf16.msra.mxu0 0
  %1328 = vmatprep.mubr.bf16.mxu0 0
  %1329 = vmatmul.mubr.bf16.gmra.mrb[0].mxu0 %v1285
  %v1330 = vpop.f32.mrb[0].mxu0
  %v1331 = vadd.f32 0.0, %v1330
  %v1332 = vpop.f32.mrb[0].mxu0
  %v1333 = vpop.f32.mrb[0].mxu0
  %v1334 = vadd.f32 0.0, %v1333
  %v1335 = vpop.f32.mrb[0].mxu0
  %1336 = vmatprep.mubr.bf16.mxu0 0
  %1337 = vmatmul.mubr.bf16.gmra.mrb[0].mxu0 %v1288
  %v1338 = vpop.f32.mrb[0].mxu0
  %v1339 = vadd.f32 0.0, %v1338
  %v1340 = vpop.f32.mrb[0].mxu0
  %v1341 = vpop.f32.mrb[0].mxu0
  %v1342 = vadd.f32 0.0, %v1341
  %v1343 = vpop.f32.mrb[0].mxu0
  %1344 = vmatprep.mubr.bf16.mxu0 0
  %1345 = vmatmul.mubr.bf16.gmra.mrb[0].mxu0 %v1291
  %v1346 = vpop.f32.mrb[0].mxu0
  %v1347 = vadd.f32 0.0, %v1346
  %v1348 = vpop.f32.mrb[0].mxu0
  %v1349 = vpop.f32.mrb[0].mxu0
  %v1350 = vadd.f32 0.0, %v1349
  %v1351 = vpop.f32.mrb[0].mxu0
  %1352 = vmatprep.mubr.bf16.mxu0 0
  %1353 = vmatmul.mubr.bf16.gmra.mrb[0].mxu0 %v1294
  %v1354 = vpop.f32.mrb[0].mxu0
  %v1355 = vadd.f32 0.0, %v1354
  %v1356 = vpop.f32.mrb[0].mxu0
  %v1357 = vpop.f32.mrb[0].mxu0
  %v1358 = vadd.f32 0.0, %v1357
  %v1359 = vpop.f32.mrb[0].mxu0
  %1360 = vdwg.mxu0
  %v1361 = vld [vmem:[%s7] sm:$0xf]
  %v1362 = vld [vmem:[%s7 + $0x4] sm:$0xf]
  %v1363 = vld [vmem:[%s7 + $0x8] sm:$0xf]
  %v1364 = vld [vmem:[%s7 + $0xc] sm:$0xf]
  %v1365 = vld [vmem:[%s7 + $0x10] sm:$0xf]
  %v1366 = vld [vmem:[%s7 + $0x14] sm:$0xf]
  %v1367 = vld [vmem:[%s7 + $0x18] sm:$0xf]
  %v1368 = vld [vmem:[%s7 + $0x1c] sm:$0xf]
  %v1369 = vld [vmem:[%s9] sm:$0xff]
  %1371 = vrot.lane.b32.xlu0 %v1369, 8
  %v1372 = vpop.permute.xlu0 %1371
  %1374 = vrot.lane.b32.xlu0 %v1369, 16
  %v1375 = vpop.permute.xlu0 %1374
  %1377 = vrot.lane.b32.xlu0 %v1369, 24
  %v1378 = vpop.permute.xlu0 %1377
  %1380 = vrot.lane.b32.xlu0 %v1369, 32
  %v1381 = vpop.permute.xlu0 %1380
  %1383 = vrot.lane.b32.xlu0 %v1369, 40
  %v1384 = vpop.permute.xlu0 %1383
  %1386 = vrot.lane.b32.xlu0 %v1369, 48
  %v1387 = vpop.permute.xlu0 %1386
  %1389 = vrot.lane.b32.xlu0 %v1369, 56
  %v1390 = vpop.permute.xlu0 %1389
  %vm1392 = vcmask 64512
  %v1393 = vsel %vm1392, %v1369, %v1372
  %vm1394 = vcmask 130048
  %v1395 = vsel %vm1394, %v1393, %v1375
  %vm1396 = vcmask 195584
  %v1397 = vsel %vm1396, %v1395, %v1378
  %v1398 = vsel %vm167, %v1397, %v1381
  %vm1399 = vcmask 326656
  %v1400 = vsel %vm1399, %v1398, %v1384
  %vm1401 = vcmask 392192
  %v1402 = vsel %vm1401, %v1400, %v1387
  %vm1403 = vcmask 457728
  %v1404 = vsel %vm1403, %v1402, %v1390
  %v1405 = vmul.f32 %v1182, %v1404
  %v1406 = vpack.c.bf16 %v1405, %v1405
  %v1415 = vunpack.c.l.b16 %v1361
  %v1416 = vunpack.c.l.b16 %v1362
  %v1417 = vunpack.c.l.b16 %v1363
  %v1418 = vunpack.c.l.b16 %v1364
  %v1419 = vunpack.c.l.b16 %v1365
  %v1420 = vunpack.c.l.b16 %v1366
  %v1421 = vunpack.c.l.b16 %v1367
  %v1422 = vunpack.c.l.b16 %v1368
  %v1423 = vpack.c.b16 %v1416, %v1415
  %v1424 = vpack.c.b16 %v1418, %v1417
  %v1425 = vpack.c.b16 %v1420, %v1419
  %v1426 = vpack.c.b16 %v1422, %v1421
  %v1432 = vsel %vm221, %v1406, 0
  %1434 = vmatprep.subr.bf16.mxu0 0
  %1435 = vmatpush1.bf16.msra.mxu0 %v1423
  %1436 = vmatprep.subr.bf16.mxu0 0
  %1437 = vmatpush1.bf16.msra.mxu0 %v1424
  %1438 = vmatprep.subr.bf16.mxu0 0
  %1439 = vmatpush1.bf16.msra.mxu0 %v1425
  %1440 = vmatprep.subr.bf16.mxu0 0
  %1441 = vmatpush1.bf16.msra.mxu0 %v1426
  %1442 = vmatprep.subr.bf16.mxu0 0
  %1443 = vmatpush1.bf16.msra.mxu0 0
  %1444 = vmatprep.subr.bf16.mxu0 0
  %1445 = vmatpush1.bf16.msra.mxu0 0
  %1446 = vmatprep.subr.bf16.mxu0 0
  %1447 = vmatpush1.bf16.msra.mxu0 0
  %1448 = vmatprep.subr.bf16.mxu0 0
  %1449 = vmatpush1.bf16.msra.mxu0 0
  %1450 = vmatprep.subr.bf16.mxu0 0
  %1451 = vmatpush1.bf16.msra.mxu0 0
  %1452 = vmatprep.subr.bf16.mxu0 0
  %1453 = vmatpush1.bf16.msra.mxu0 0
  %1454 = vmatprep.subr.bf16.mxu0 0
  %1455 = vmatpush1.bf16.msra.mxu0 0
  %1456 = vmatprep.subr.bf16.mxu0 0
  %1457 = vmatpush1.bf16.msra.mxu0 0
  %1458 = vmatprep.subr.bf16.mxu0 0
  %1459 = vmatpush1.bf16.msra.mxu0 0
  %1460 = vmatprep.subr.bf16.mxu0 0
  %1461 = vmatpush1.bf16.msra.mxu0 0
  %1462 = vmatprep.subr.bf16.mxu0 0
  %1463 = vmatpush1.bf16.msra.mxu0 0
  %1464 = vmatprep.subr.bf16.mxu0 0
  %1465 = vmatpush1.bf16.msra.mxu0 0
  %1466 = vmatprep.mubr.bf16.mxu0 0
  %1467 = vmatmul.mubr.bf16.gmra.mrb[0].mxu0 %v1432
  %v1468 = vpop.f32.mrb[0].mxu0
  %v1469 = vadd.f32 %v1331, %v1468
  %v1470 = vpop.f32.mrb[0].mxu0
  %v1471 = vpop.f32.mrb[0].mxu0
  %v1472 = vpop.f32.mrb[0].mxu0
  %1473 = vdwg.mxu0
  %1475 = vrot.lane.b32.xlu0 %v1469, 8
  %v1476 = vpop.permute.xlu0 %1475
  %1478 = vrot.lane.b32.xlu0 %v1469, 16
  %v1479 = vpop.permute.xlu0 %1478
  %1481 = vrot.lane.b32.xlu0 %v1469, 24
  %v1482 = vpop.permute.xlu0 %1481
  %1484 = vrot.lane.b32.xlu0 %v1469, 32
  %v1485 = vpop.permute.xlu0 %1484
  %1487 = vrot.lane.b32.xlu0 %v1469, 40
  %v1488 = vpop.permute.xlu0 %1487
  %1490 = vrot.lane.b32.xlu0 %v1469, 48
  %v1491 = vpop.permute.xlu0 %1490
  %1493 = vrot.lane.b32.xlu0 %v1469, 56
  %v1494 = vpop.permute.xlu0 %1493
  %v1496 = vsel %vm1392, %v1469, %v1476
  %v1497 = vsel %vm1394, %v1496, %v1479
  %v1498 = vsel %vm1396, %v1497, %v1482
  %v1499 = vsel %vm167, %v1498, %v1485
  %v1500 = vsel %vm1399, %v1499, %v1488
  %v1501 = vsel %vm1401, %v1500, %v1491
  %v1502 = vsel %vm1403, %v1501, %v1494
  %v1503 = vmul.f32 %v1185, %v1502
  %v1504 = vpack.c.bf16 %v1503, %v1503
  %v1506 = vsel %vm221, %v1504, 0
  %1508 = vmatprep.subr.bf16.mxu0 0
  %1509 = vmatpush1.bf16.msra.mxu0 %v1423
  %1510 = vmatprep.subr.bf16.mxu0 0
  %1511 = vmatpush1.bf16.msra.mxu0 %v1424
  %1512 = vmatprep.subr.bf16.mxu0 0
  %1513 = vmatpush1.bf16.msra.mxu0 %v1425
  %1514 = vmatprep.subr.bf16.mxu0 0
  %1515 = vmatpush1.bf16.msra.mxu0 %v1426
  %1516 = vmatprep.subr.bf16.mxu0 0
  %1517 = vmatpush1.bf16.msra.mxu0 0
  %1518 = vmatprep.subr.bf16.mxu0 0
  %1519 = vmatpush1.bf16.msra.mxu0 0
  %1520 = vmatprep.subr.bf16.mxu0 0
  %1521 = vmatpush1.bf16.msra.mxu0 0
  %1522 = vmatprep.subr.bf16.mxu0 0
  %1523 = vmatpush1.bf16.msra.mxu0 0
  %1524 = vmatprep.subr.bf16.mxu0 0
  %1525 = vmatpush1.bf16.msra.mxu0 0
  %1526 = vmatprep.subr.bf16.mxu0 0
  %1527 = vmatpush1.bf16.msra.mxu0 0
  %1528 = vmatprep.subr.bf16.mxu0 0
  %1529 = vmatpush1.bf16.msra.mxu0 0
  %1530 = vmatprep.subr.bf16.mxu0 0
  %1531 = vmatpush1.bf16.msra.mxu0 0
  %1532 = vmatprep.subr.bf16.mxu0 0
  %1533 = vmatpush1.bf16.msra.mxu0 0
  %1534 = vmatprep.subr.bf16.mxu0 0
  %1535 = vmatpush1.bf16.msra.mxu0 0
  %1536 = vmatprep.subr.bf16.mxu0 0
  %1537 = vmatpush1.bf16.msra.mxu0 0
  %1538 = vmatprep.subr.bf16.mxu0 0
  %1539 = vmatpush1.bf16.msra.mxu0 0
  %1540 = vmatprep.mubr.bf16.mxu0 0
  %1541 = vmatmul.mubr.bf16.gmra.mrb[0].mxu0 %v1506
  %v1542 = vpop.f32.mrb[0].mxu0
  %v1543 = vadd.f32 %v1334, %v1542
  %v1544 = vpop.f32.mrb[0].mxu0
  %v1545 = vpop.f32.mrb[0].mxu0
  %v1546 = vpop.f32.mrb[0].mxu0
  %1547 = vdwg.mxu0
  %1549 = vrot.lane.b32.xlu0 %v1543, 8
  %v1550 = vpop.permute.xlu0 %1549
  %1552 = vrot.lane.b32.xlu0 %v1543, 16
  %v1553 = vpop.permute.xlu0 %1552
  %1555 = vrot.lane.b32.xlu0 %v1543, 24
  %v1556 = vpop.permute.xlu0 %1555
  %1558 = vrot.lane.b32.xlu0 %v1543, 32
  %v1559 = vpop.permute.xlu0 %1558
  %1561 = vrot.lane.b32.xlu0 %v1543, 40
  %v1562 = vpop.permute.xlu0 %1561
  %1564 = vrot.lane.b32.xlu0 %v1543, 48
  %v1565 = vpop.permute.xlu0 %1564
  %1567 = vrot.lane.b32.xlu0 %v1543, 56
  %v1568 = vpop.permute.xlu0 %1567
  %v1570 = vsel %vm1392, %v1543, %v1550
  %v1571 = vsel %vm1394, %v1570, %v1553
  %v1572 = vsel %vm1396, %v1571, %v1556
  %v1573 = vsel %vm167, %v1572, %v1559
  %v1574 = vsel %vm1399, %v1573, %v1562
  %v1575 = vsel %vm1401, %v1574, %v1565
  %v1576 = vsel %vm1403, %v1575, %v1568
  %v1577 = vmul.f32 %v1190, %v1576
  %v1578 = vpack.c.bf16 %v1577, %v1577
  %v1580 = vsel %vm221, %v1578, 0
  %1582 = vmatprep.subr.bf16.mxu0 0
  %1583 = vmatpush1.bf16.msra.mxu0 %v1423
  %1584 = vmatprep.subr.bf16.mxu0 0
  %1585 = vmatpush1.bf16.msra.mxu0 %v1424
  %1586 = vmatprep.subr.bf16.mxu0 0
  %1587 = vmatpush1.bf16.msra.mxu0 %v1425
  %1588 = vmatprep.subr.bf16.mxu0 0
  %1589 = vmatpush1.bf16.msra.mxu0 %v1426
  %1590 = vmatprep.subr.bf16.mxu0 0
  %1591 = vmatpush1.bf16.msra.mxu0 0
  %1592 = vmatprep.subr.bf16.mxu0 0
  %1593 = vmatpush1.bf16.msra.mxu0 0
  %1594 = vmatprep.subr.bf16.mxu0 0
  %1595 = vmatpush1.bf16.msra.mxu0 0
  %1596 = vmatprep.subr.bf16.mxu0 0
  %1597 = vmatpush1.bf16.msra.mxu0 0
  %1598 = vmatprep.subr.bf16.mxu0 0
  %1599 = vmatpush1.bf16.msra.mxu0 0
  %1600 = vmatprep.subr.bf16.mxu0 0
  %1601 = vmatpush1.bf16.msra.mxu0 0
  %1602 = vmatprep.subr.bf16.mxu0 0
  %1603 = vmatpush1.bf16.msra.mxu0 0
  %1604 = vmatprep.subr.bf16.mxu0 0
  %1605 = vmatpush1.bf16.msra.mxu0 0
  %1606 = vmatprep.subr.bf16.mxu0 0
  %1607 = vmatpush1.bf16.msra.mxu0 0
  %1608 = vmatprep.subr.bf16.mxu0 0
  %1609 = vmatpush1.bf16.msra.mxu0 0
  %1610 = vmatprep.subr.bf16.mxu0 0
  %1611 = vmatpush1.bf16.msra.mxu0 0
  %1612 = vmatprep.subr.bf16.mxu0 0
  %1613 = vmatpush1.bf16.msra.mxu0 0
  %1614 = vmatprep.mubr.bf16.mxu0 0
  %1615 = vmatmul.mubr.bf16.gmra.mrb[0].mxu0 %v1580
  %v1616 = vpop.f32.mrb[0].mxu0
  %v1617 = vadd.f32 %v1339, %v1616
  %v1618 = vpop.f32.mrb[0].mxu0
  %v1619 = vpop.f32.mrb[0].mxu0
  %v1620 = vpop.f32.mrb[0].mxu0
  %1621 = vdwg.mxu0
  %1623 = vrot.lane.b32.xlu0 %v1617, 8
  %v1624 = vpop.permute.xlu0 %1623
  %1626 = vrot.lane.b32.xlu0 %v1617, 16
  %v1627 = vpop.permute.xlu0 %1626
  %1629 = vrot.lane.b32.xlu0 %v1617, 24
  %v1630 = vpop.permute.xlu0 %1629
  %1632 = vrot.lane.b32.xlu0 %v1617, 32
  %v1633 = vpop.permute.xlu0 %1632
  %1635 = vrot.lane.b32.xlu0 %v1617, 40
  %v1636 = vpop.permute.xlu0 %1635
  %1638 = vrot.lane.b32.xlu0 %v1617, 48
  %v1639 = vpop.permute.xlu0 %1638
  %1641 = vrot.lane.b32.xlu0 %v1617, 56
  %v1642 = vpop.permute.xlu0 %1641
  %v1644 = vsel %vm1392, %v1617, %v1624
  %v1645 = vsel %vm1394, %v1644, %v1627
  %v1646 = vsel %vm1396, %v1645, %v1630
  %v1647 = vsel %vm167, %v1646, %v1633
  %v1648 = vsel %vm1399, %v1647, %v1636
  %v1649 = vsel %vm1401, %v1648, %v1639
  %v1650 = vsel %vm1403, %v1649, %v1642
  %v1651 = vmul.f32 %v1193, %v1650
  %v1652 = vpack.c.bf16 %v1651, %v1651
  %v1654 = vsel %vm221, %v1652, 0
  %1656 = vmatprep.subr.bf16.mxu0 0
  %1657 = vmatpush1.bf16.msra.mxu0 %v1423
  %1658 = vmatprep.subr.bf16.mxu0 0
  %1659 = vmatpush1.bf16.msra.mxu0 %v1424
  %1660 = vmatprep.subr.bf16.mxu0 0
  %1661 = vmatpush1.bf16.msra.mxu0 %v1425
  %1662 = vmatprep.subr.bf16.mxu0 0
  %1663 = vmatpush1.bf16.msra.mxu0 %v1426
  %1664 = vmatprep.subr.bf16.mxu0 0
  %1665 = vmatpush1.bf16.msra.mxu0 0
  %1666 = vmatprep.subr.bf16.mxu0 0
  %1667 = vmatpush1.bf16.msra.mxu0 0
  %1668 = vmatprep.subr.bf16.mxu0 0
  %1669 = vmatpush1.bf16.msra.mxu0 0
  %1670 = vmatprep.subr.bf16.mxu0 0
  %1671 = vmatpush1.bf16.msra.mxu0 0
  %1672 = vmatprep.subr.bf16.mxu0 0
  %1673 = vmatpush1.bf16.msra.mxu0 0
  %1674 = vmatprep.subr.bf16.mxu0 0
  %1675 = vmatpush1.bf16.msra.mxu0 0
  %1676 = vmatprep.subr.bf16.mxu0 0
  %1677 = vmatpush1.bf16.msra.mxu0 0
  %1678 = vmatprep.subr.bf16.mxu0 0
  %1679 = vmatpush1.bf16.msra.mxu0 0
  %1680 = vmatprep.subr.bf16.mxu0 0
  %1681 = vmatpush1.bf16.msra.mxu0 0
  %1682 = vmatprep.subr.bf16.mxu0 0
  %1683 = vmatpush1.bf16.msra.mxu0 0
  %1684 = vmatprep.subr.bf16.mxu0 0
  %1685 = vmatpush1.bf16.msra.mxu0 0
  %1686 = vmatprep.subr.bf16.mxu0 0
  %1687 = vmatpush1.bf16.msra.mxu0 0
  %1688 = vmatprep.mubr.bf16.mxu0 0
  %1689 = vmatmul.mubr.bf16.gmra.mrb[0].mxu0 %v1654
  %v1690 = vpop.f32.mrb[0].mxu0
  %v1691 = vadd.f32 %v1342, %v1690
  %v1692 = vpop.f32.mrb[0].mxu0
  %v1693 = vpop.f32.mrb[0].mxu0
  %v1694 = vpop.f32.mrb[0].mxu0
  %1695 = vdwg.mxu0
  %1697 = vrot.lane.b32.xlu0 %v1691, 8
  %v1698 = vpop.permute.xlu0 %1697
  %1700 = vrot.lane.b32.xlu0 %v1691, 16
  %v1701 = vpop.permute.xlu0 %1700
  %1703 = vrot.lane.b32.xlu0 %v1691, 24
  %v1704 = vpop.permute.xlu0 %1703
  %1706 = vrot.lane.b32.xlu0 %v1691, 32
  %v1707 = vpop.permute.xlu0 %1706
  %1709 = vrot.lane.b32.xlu0 %v1691, 40
  %v1710 = vpop.permute.xlu0 %1709
  %1712 = vrot.lane.b32.xlu0 %v1691, 48
  %v1713 = vpop.permute.xlu0 %1712
  %1715 = vrot.lane.b32.xlu0 %v1691, 56
  %v1716 = vpop.permute.xlu0 %1715
  %v1718 = vsel %vm1392, %v1691, %v1698
  %v1719 = vsel %vm1394, %v1718, %v1701
  %v1720 = vsel %vm1396, %v1719, %v1704
  %v1721 = vsel %vm167, %v1720, %v1707
  %v1722 = vsel %vm1399, %v1721, %v1710
  %v1723 = vsel %vm1401, %v1722, %v1713
  %v1724 = vsel %vm1403, %v1723, %v1716
  %v1725 = vmul.f32 %v1198, %v1724
  %v1726 = vpack.c.bf16 %v1725, %v1725
  %v1728 = vsel %vm221, %v1726, 0
  %1730 = vmatprep.subr.bf16.mxu0 0
  %1731 = vmatpush1.bf16.msra.mxu0 %v1423
  %1732 = vmatprep.subr.bf16.mxu0 0
  %1733 = vmatpush1.bf16.msra.mxu0 %v1424
  %1734 = vmatprep.subr.bf16.mxu0 0
  %1735 = vmatpush1.bf16.msra.mxu0 %v1425
  %1736 = vmatprep.subr.bf16.mxu0 0
  %1737 = vmatpush1.bf16.msra.mxu0 %v1426
  %1738 = vmatprep.subr.bf16.mxu0 0
  %1739 = vmatpush1.bf16.msra.mxu0 0
  %1740 = vmatprep.subr.bf16.mxu0 0
  %1741 = vmatpush1.bf16.msra.mxu0 0
  %1742 = vmatprep.subr.bf16.mxu0 0
  %1743 = vmatpush1.bf16.msra.mxu0 0
  %1744 = vmatprep.subr.bf16.mxu0 0
  %1745 = vmatpush1.bf16.msra.mxu0 0
  %1746 = vmatprep.subr.bf16.mxu0 0
  %1747 = vmatpush1.bf16.msra.mxu0 0
  %1748 = vmatprep.subr.bf16.mxu0 0
  %1749 = vmatpush1.bf16.msra.mxu0 0
  %1750 = vmatprep.subr.bf16.mxu0 0
  %1751 = vmatpush1.bf16.msra.mxu0 0
  %1752 = vmatprep.subr.bf16.mxu0 0
  %1753 = vmatpush1.bf16.msra.mxu0 0
  %1754 = vmatprep.subr.bf16.mxu0 0
  %1755 = vmatpush1.bf16.msra.mxu0 0
  %1756 = vmatprep.subr.bf16.mxu0 0
  %1757 = vmatpush1.bf16.msra.mxu0 0
  %1758 = vmatprep.subr.bf16.mxu0 0
  %1759 = vmatpush1.bf16.msra.mxu0 0
  %1760 = vmatprep.subr.bf16.mxu0 0
  %1761 = vmatpush1.bf16.msra.mxu0 0
  %1762 = vmatprep.mubr.bf16.mxu0 0
  %1763 = vmatmul.mubr.bf16.gmra.mrb[0].mxu0 %v1728
  %v1764 = vpop.f32.mrb[0].mxu0
  %v1765 = vadd.f32 %v1347, %v1764
  %v1766 = vpop.f32.mrb[0].mxu0
  %v1767 = vpop.f32.mrb[0].mxu0
  %v1768 = vpop.f32.mrb[0].mxu0
  %1769 = vdwg.mxu0
  %1771 = vrot.lane.b32.xlu0 %v1765, 8
  %v1772 = vpop.permute.xlu0 %1771
  %1774 = vrot.lane.b32.xlu0 %v1765, 16
  %v1775 = vpop.permute.xlu0 %1774
  %1777 = vrot.lane.b32.xlu0 %v1765, 24
  %v1778 = vpop.permute.xlu0 %1777
  %1780 = vrot.lane.b32.xlu0 %v1765, 32
  %v1781 = vpop.permute.xlu0 %1780
  %1783 = vrot.lane.b32.xlu0 %v1765, 40
  %v1784 = vpop.permute.xlu0 %1783
  %1786 = vrot.lane.b32.xlu0 %v1765, 48
  %v1787 = vpop.permute.xlu0 %1786
  %1789 = vrot.lane.b32.xlu0 %v1765, 56
  %v1790 = vpop.permute.xlu0 %1789
  %v1792 = vsel %vm1392, %v1765, %v1772
  %v1793 = vsel %vm1394, %v1792, %v1775
  %v1794 = vsel %vm1396, %v1793, %v1778
  %v1795 = vsel %vm167, %v1794, %v1781
  %v1796 = vsel %vm1399, %v1795, %v1784
  %v1797 = vsel %vm1401, %v1796, %v1787
  %v1798 = vsel %vm1403, %v1797, %v1790
  %v1799 = vmul.f32 %v1201, %v1798
  %v1800 = vpack.c.bf16 %v1799, %v1799
  %v1802 = vsel %vm221, %v1800, 0
  %1804 = vmatprep.subr.bf16.mxu0 0
  %1805 = vmatpush1.bf16.msra.mxu0 %v1423
  %1806 = vmatprep.subr.bf16.mxu0 0
  %1807 = vmatpush1.bf16.msra.mxu0 %v1424
  %1808 = vmatprep.subr.bf16.mxu0 0
  %1809 = vmatpush1.bf16.msra.mxu0 %v1425
  %1810 = vmatprep.subr.bf16.mxu0 0
  %1811 = vmatpush1.bf16.msra.mxu0 %v1426
  %1812 = vmatprep.subr.bf16.mxu0 0
  %1813 = vmatpush1.bf16.msra.mxu0 0
  %1814 = vmatprep.subr.bf16.mxu0 0
  %1815 = vmatpush1.bf16.msra.mxu0 0
  %1816 = vmatprep.subr.bf16.mxu0 0
  %1817 = vmatpush1.bf16.msra.mxu0 0
  %1818 = vmatprep.subr.bf16.mxu0 0
  %1819 = vmatpush1.bf16.msra.mxu0 0
  %1820 = vmatprep.subr.bf16.mxu0 0
  %1821 = vmatpush1.bf16.msra.mxu0 0
  %1822 = vmatprep.subr.bf16.mxu0 0
  %1823 = vmatpush1.bf16.msra.mxu0 0
  %1824 = vmatprep.subr.bf16.mxu0 0
  %1825 = vmatpush1.bf16.msra.mxu0 0
  %1826 = vmatprep.subr.bf16.mxu0 0
  %1827 = vmatpush1.bf16.msra.mxu0 0
  %1828 = vmatprep.subr.bf16.mxu0 0
  %1829 = vmatpush1.bf16.msra.mxu0 0
  %1830 = vmatprep.subr.bf16.mxu0 0
  %1831 = vmatpush1.bf16.msra.mxu0 0
  %1832 = vmatprep.subr.bf16.mxu0 0
  %1833 = vmatpush1.bf16.msra.mxu0 0
  %1834 = vmatprep.subr.bf16.mxu0 0
  %1835 = vmatpush1.bf16.msra.mxu0 0
  %1836 = vmatprep.mubr.bf16.mxu0 0
  %1837 = vmatmul.mubr.bf16.gmra.mrb[0].mxu0 %v1802
  %v1838 = vpop.f32.mrb[0].mxu0
  %v1839 = vadd.f32 %v1350, %v1838
  %v1840 = vpop.f32.mrb[0].mxu0
  %v1841 = vpop.f32.mrb[0].mxu0
  %v1842 = vpop.f32.mrb[0].mxu0
  %1843 = vdwg.mxu0
  %1845 = vrot.lane.b32.xlu0 %v1839, 8
  %v1846 = vpop.permute.xlu0 %1845
  %1848 = vrot.lane.b32.xlu0 %v1839, 16
  %v1849 = vpop.permute.xlu0 %1848
  %1851 = vrot.lane.b32.xlu0 %v1839, 24
  %v1852 = vpop.permute.xlu0 %1851
  %1854 = vrot.lane.b32.xlu0 %v1839, 32
  %v1855 = vpop.permute.xlu0 %1854
  %1857 = vrot.lane.b32.xlu0 %v1839, 40
  %v1858 = vpop.permute.xlu0 %1857
  %1860 = vrot.lane.b32.xlu0 %v1839, 48
  %v1861 = vpop.permute.xlu0 %1860
  %1863 = vrot.lane.b32.xlu0 %v1839, 56
  %v1864 = vpop.permute.xlu0 %1863
  %v1866 = vsel %vm1392, %v1839, %v1846
  %v1867 = vsel %vm1394, %v1866, %v1849
  %v1868 = vsel %vm1396, %v1867, %v1852
  %v1869 = vsel %vm167, %v1868, %v1855
  %v1870 = vsel %vm1399, %v1869, %v1858
  %v1871 = vsel %vm1401, %v1870, %v1861
  %v1872 = vsel %vm1403, %v1871, %v1864
  %v1873 = vmul.f32 %v1206, %v1872
  %v1874 = vpack.c.bf16 %v1873, %v1873
  %v1876 = vsel %vm221, %v1874, 0
  %1878 = vmatprep.subr.bf16.mxu0 0
  %1879 = vmatpush1.bf16.msra.mxu0 %v1423
  %1880 = vmatprep.subr.bf16.mxu0 0
  %1881 = vmatpush1.bf16.msra.mxu0 %v1424
  %1882 = vmatprep.subr.bf16.mxu0 0
  %1883 = vmatpush1.bf16.msra.mxu0 %v1425
  %1884 = vmatprep.subr.bf16.mxu0 0
  %1885 = vmatpush1.bf16.msra.mxu0 %v1426
  %1886 = vmatprep.subr.bf16.mxu0 0
  %1887 = vmatpush1.bf16.msra.mxu0 0
  %1888 = vmatprep.subr.bf16.mxu0 0
  %1889 = vmatpush1.bf16.msra.mxu0 0
  %1890 = vmatprep.subr.bf16.mxu0 0
  %1891 = vmatpush1.bf16.msra.mxu0 0
  %1892 = vmatprep.subr.bf16.mxu0 0
  %1893 = vmatpush1.bf16.msra.mxu0 0
  %1894 = vmatprep.subr.bf16.mxu0 0
  %1895 = vmatpush1.bf16.msra.mxu0 0
  %1896 = vmatprep.subr.bf16.mxu0 0
  %1897 = vmatpush1.bf16.msra.mxu0 0
  %1898 = vmatprep.subr.bf16.mxu0 0
  %1899 = vmatpush1.bf16.msra.mxu0 0
  %1900 = vmatprep.subr.bf16.mxu0 0
  %1901 = vmatpush1.bf16.msra.mxu0 0
  %1902 = vmatprep.subr.bf16.mxu0 0
  %1903 = vmatpush1.bf16.msra.mxu0 0
  %1904 = vmatprep.subr.bf16.mxu0 0
  %1905 = vmatpush1.bf16.msra.mxu0 0
  %1906 = vmatprep.subr.bf16.mxu0 0
  %1907 = vmatpush1.bf16.msra.mxu0 0
  %1908 = vmatprep.subr.bf16.mxu0 0
  %1909 = vmatpush1.bf16.msra.mxu0 0
  %1910 = vmatprep.mubr.bf16.mxu0 0
  %1911 = vmatmul.mubr.bf16.gmra.mrb[0].mxu0 %v1876
  %v1912 = vpop.f32.mrb[0].mxu0
  %v1913 = vadd.f32 %v1355, %v1912
  %v1914 = vpop.f32.mrb[0].mxu0
  %v1915 = vpop.f32.mrb[0].mxu0
  %v1916 = vpop.f32.mrb[0].mxu0
  %1917 = vdwg.mxu0
  %1919 = vrot.lane.b32.xlu0 %v1913, 8
  %v1920 = vpop.permute.xlu0 %1919
  %1922 = vrot.lane.b32.xlu0 %v1913, 16
  %v1923 = vpop.permute.xlu0 %1922
  %1925 = vrot.lane.b32.xlu0 %v1913, 24
  %v1926 = vpop.permute.xlu0 %1925
  %1928 = vrot.lane.b32.xlu0 %v1913, 32
  %v1929 = vpop.permute.xlu0 %1928
  %1931 = vrot.lane.b32.xlu0 %v1913, 40
  %v1932 = vpop.permute.xlu0 %1931
  %1934 = vrot.lane.b32.xlu0 %v1913, 48
  %v1935 = vpop.permute.xlu0 %1934
  %1937 = vrot.lane.b32.xlu0 %v1913, 56
  %v1938 = vpop.permute.xlu0 %1937
  %v1940 = vsel %vm1392, %v1913, %v1920
  %v1941 = vsel %vm1394, %v1940, %v1923
  %v1942 = vsel %vm1396, %v1941, %v1926
  %v1943 = vsel %vm167, %v1942, %v1929
  %v1944 = vsel %vm1399, %v1943, %v1932
  %v1945 = vsel %vm1401, %v1944, %v1935
  %v1946 = vsel %vm1403, %v1945, %v1938
  %v1947 = vmul.f32 %v1209, %v1946
  %v1948 = vpack.c.bf16 %v1947, %v1947
  %v1950 = vsel %vm221, %v1948, 0
  %1952 = vmatprep.subr.bf16.mxu0 0
  %1953 = vmatpush1.bf16.msra.mxu0 %v1423
  %1954 = vmatprep.subr.bf16.mxu0 0
  %1955 = vmatpush1.bf16.msra.mxu0 %v1424
  %1956 = vmatprep.subr.bf16.mxu0 0
  %1957 = vmatpush1.bf16.msra.mxu0 %v1425
  %1958 = vmatprep.subr.bf16.mxu0 0
  %1959 = vmatpush1.bf16.msra.mxu0 %v1426
  %1960 = vmatprep.subr.bf16.mxu0 0
  %1961 = vmatpush1.bf16.msra.mxu0 0
  %1962 = vmatprep.subr.bf16.mxu0 0
  %1963 = vmatpush1.bf16.msra.mxu0 0
  %1964 = vmatprep.subr.bf16.mxu0 0
  %1965 = vmatpush1.bf16.msra.mxu0 0
  %1966 = vmatprep.subr.bf16.mxu0 0
  %1967 = vmatpush1.bf16.msra.mxu0 0
  %1968 = vmatprep.subr.bf16.mxu0 0
  %1969 = vmatpush1.bf16.msra.mxu0 0
  %1970 = vmatprep.subr.bf16.mxu0 0
  %1971 = vmatpush1.bf16.msra.mxu0 0
  %1972 = vmatprep.subr.bf16.mxu0 0
  %1973 = vmatpush1.bf16.msra.mxu0 0
  %1974 = vmatprep.subr.bf16.mxu0 0
  %1975 = vmatpush1.bf16.msra.mxu0 0
  %1976 = vmatprep.subr.bf16.mxu0 0
  %1977 = vmatpush1.bf16.msra.mxu0 0
  %1978 = vmatprep.subr.bf16.mxu0 0
  %1979 = vmatpush1.bf16.msra.mxu0 0
  %1980 = vmatprep.subr.bf16.mxu0 0
  %1981 = vmatpush1.bf16.msra.mxu0 0
  %1982 = vmatprep.subr.bf16.mxu0 0
  %1983 = vmatpush1.bf16.msra.mxu0 0
  %1984 = vmatprep.mubr.bf16.mxu0 0
  %1985 = vmatmul.mubr.bf16.gmra.mrb[0].mxu0 %v1950
  %v1986 = vpop.f32.mrb[0].mxu0
  %v1987 = vadd.f32 %v1358, %v1986
  %v1988 = vpop.f32.mrb[0].mxu0
  %v1989 = vpop.f32.mrb[0].mxu0
  %v1990 = vpop.f32.mrb[0].mxu0
  %1991 = vdwg.mxu0
  %v1992 = vpack.c.bf16 %v1543, %v1469
  %v1993 = vpack.c.bf16 %v1691, %v1617
  %v1994 = vpack.c.bf16 %v1839, %v1765
  %v1995 = vpack.c.bf16 %v1987, %v1913
  %v1996 = vld [vmem:[%s6] sm:$0xf]
  %v1998 = vsel %vm1392, %v1992, 0
  %v2001 = vsel %vm1392, %v1993, 0
  %v2004 = vsel %vm1392, %v1994, 0
  %v2007 = vsel %vm1392, %v1995, 0
  %vm2009 = vcmask 1043456
  %v2011 = vsel %vm2009, %v1996, 0
  %2013 = vmatprep.subr.bf16.mxu0 0
  %2014 = vmatpush1.bf16.msra.mxu0 %v2011
  %2015 = vmatprep.subr.bf16.mxu0 0
  %2016 = vmatpush1.bf16.msra.mxu0 0
  %2017 = vmatprep.subr.bf16.mxu0 0
  %2018 = vmatpush1.bf16.msra.mxu0 0
  %2019 = vmatprep.subr.bf16.mxu0 0
  %2020 = vmatpush1.bf16.msra.mxu0 0
  %2021 = vmatprep.subr.bf16.mxu0 0
  %2022 = vmatpush1.bf16.msra.mxu0 0
  %2023 = vmatprep.subr.bf16.mxu0 0
  %2024 = vmatpush1.bf16.msra.mxu0 0
  %2025 = vmatprep.subr.bf16.mxu0 0
  %2026 = vmatpush1.bf16.msra.mxu0 0
  %2027 = vmatprep.subr.bf16.mxu0 0
  %2028 = vmatpush1.bf16.msra.mxu0 0
  %2029 = vmatprep.subr.bf16.mxu0 0
  %2030 = vmatpush1.bf16.msra.mxu0 0
  %2031 = vmatprep.subr.bf16.mxu0 0
  %2032 = vmatpush1.bf16.msra.mxu0 0
  %2033 = vmatprep.subr.bf16.mxu0 0
  %2034 = vmatpush1.bf16.msra.mxu0 0
  %2035 = vmatprep.subr.bf16.mxu0 0
  %2036 = vmatpush1.bf16.msra.mxu0 0
  %2037 = vmatprep.subr.bf16.mxu0 0
  %2038 = vmatpush1.bf16.msra.mxu0 0
  %2039 = vmatprep.subr.bf16.mxu0 0
  %2040 = vmatpush1.bf16.msra.mxu0 0
  %2041 = vmatprep.subr.bf16.mxu0 0
  %2042 = vmatpush1.bf16.msra.mxu0 0
  %2043 = vmatprep.subr.bf16.mxu0 0
  %2044 = vmatpush1.bf16.msra.mxu0 0
  %2045 = vmatprep.mubr.bf16.mxu0 0
  %2046 = vmatmul.mubr.bf16.gmra.mrb[0].mxu0 %v1998
  %v2047 = vpop.f32.mrb[0].mxu0
  %v2048 = vadd.f32 0.0, %v2047
  %v2049 = vpop.f32.mrb[0].mxu0
  %v2050 = vpop.f32.mrb[0].mxu0
  %v2051 = vadd.f32 0.0, %v2050
  %v2052 = vpop.f32.mrb[0].mxu0
  %2053 = vmatprep.mubr.bf16.mxu0 0
  %2054 = vmatmul.mubr.bf16.gmra.mrb[0].mxu0 %v2001
  %v2055 = vpop.f32.mrb[0].mxu0
  %v2056 = vadd.f32 0.0, %v2055
  %v2057 = vpop.f32.mrb[0].mxu0
  %v2058 = vpop.f32.mrb[0].mxu0
  %v2059 = vadd.f32 0.0, %v2058
  %v2060 = vpop.f32.mrb[0].mxu0
  %2061 = vmatprep.mubr.bf16.mxu0 0
  %2062 = vmatmul.mubr.bf16.gmra.mrb[0].mxu0 %v2004
  %v2063 = vpop.f32.mrb[0].mxu0
  %v2064 = vadd.f32 0.0, %v2063
  %v2065 = vpop.f32.mrb[0].mxu0
  %v2066 = vpop.f32.mrb[0].mxu0
  %v2067 = vadd.f32 0.0, %v2066
  %v2068 = vpop.f32.mrb[0].mxu0
  %2069 = vmatprep.mubr.bf16.mxu0 0
  %2070 = vmatmul.mubr.bf16.gmra.mrb[0].mxu0 %v2007
  %v2071 = vpop.f32.mrb[0].mxu0
  %v2072 = vadd.f32 0.0, %v2071
  %v2073 = vpop.f32.mrb[0].mxu0
  %v2074 = vpop.f32.mrb[0].mxu0
  %v2075 = vadd.f32 0.0, %v2074
  %v2076 = vpop.f32.mrb[0].mxu0
  %2077 = vdwg.mxu0
  %2079 = vrot.lane.b32.xlu0 %v1469, 96
  %v2080 = vpop.permute.xlu0 %2079
  %2081 = vrot.lane.b32.xlu0 %v1543, 96
  %v2082 = vpop.permute.xlu0 %2081
  %2083 = vrot.lane.b32.xlu0 %v1617, 96
  %v2084 = vpop.permute.xlu0 %2083
  %2085 = vrot.lane.b32.xlu0 %v1691, 96
  %v2086 = vpop.permute.xlu0 %2085
  %2087 = vrot.lane.b32.xlu0 %v1765, 96
  %v2088 = vpop.permute.xlu0 %2087
  %2089 = vrot.lane.b32.xlu0 %v1839, 96
  %v2090 = vpop.permute.xlu0 %2089
  %2091 = vrot.lane.b32.xlu0 %v1913, 96
  %v2092 = vpop.permute.xlu0 %2091
  %2093 = vrot.lane.b32.xlu0 %v1987, 96
  %v2094 = vpop.permute.xlu0 %2093
  %2111 = vrot.lane.b32.xlu0 %v2048, 104
  %v2112 = vpop.permute.xlu0 %2111
  %2113 = vrot.lane.b32.xlu0 %v2051, 104
  %v2114 = vpop.permute.xlu0 %2113
  %2115 = vrot.lane.b32.xlu0 %v2056, 104
  %v2116 = vpop.permute.xlu0 %2115
  %2117 = vrot.lane.b32.xlu0 %v2059, 104
  %v2118 = vpop.permute.xlu0 %2117
  %2119 = vrot.lane.b32.xlu0 %v2064, 104
  %v2120 = vpop.permute.xlu0 %2119
  %2121 = vrot.lane.b32.xlu0 %v2067, 104
  %v2122 = vpop.permute.xlu0 %2121
  %2123 = vrot.lane.b32.xlu0 %v2072, 104
  %v2124 = vpop.permute.xlu0 %2123
  %2125 = vrot.lane.b32.xlu0 %v2075, 104
  %v2126 = vpop.permute.xlu0 %2125
  %v2135 = vsel %vm1093, %v1182, %v2080
  %v2136 = vsel %vm1093, %v1185, %v2082
  %v2137 = vsel %vm1093, %v1190, %v2084
  %v2138 = vsel %vm1093, %v1193, %v2086
  %v2139 = vsel %vm1093, %v1198, %v2088
  %v2140 = vsel %vm1093, %v1201, %v2090
  %v2141 = vsel %vm1093, %v1206, %v2092
  %v2142 = vsel %vm1093, %v1209, %v2094
  %vm2143 = vcmask 850944
  %v2144 = vsel %vm2143, %v2135, %v2112
  %v2145 = vsel %vm2143, %v2136, %v2114
  %v2146 = vsel %vm2143, %v2137, %v2116
  %v2147 = vsel %vm2143, %v2138, %v2118
  %v2148 = vsel %vm2143, %v2139, %v2120
  %v2149 = vsel %vm2143, %v2140, %v2122
  %v2150 = vsel %vm2143, %v2141, %v2124
  %v2151 = vsel %vm2143, %v2142, %v2126
  %vm2152 = vcmask 883712
  %v2153 = vsel %vm2152, %v2144, 0.0
  %v2154 = vsel %vm2152, %v2145, 0.0
  %v2155 = vsel %vm2152, %v2146, 0.0
  %v2156 = vsel %vm2152, %v2147, 0.0
  %v2157 = vsel %vm2152, %v2148, 0.0
  %v2158 = vsel %vm2152, %v2149, 0.0
  %v2159 = vsel %vm2152, %v2150, 0.0
  %v2160 = vsel %vm2152, %v2151, 0.0
  %2161 = vst [vmem:[%s10] sm:$0xff] %v2153
  %2162 = vst [vmem:[%s10 + $0x8] sm:$0xff] %v2154
  %2163 = vst [vmem:[%s10 + $0x10] sm:$0xff] %v2155
  %2164 = vst [vmem:[%s10 + $0x18] sm:$0xff] %v2156
  %2165 = vst [vmem:[%s10 + $0x20] sm:$0xff] %v2157
  %2166 = vst [vmem:[%s10 + $0x28] sm:$0xff] %v2158
  %2167 = vst [vmem:[%s10 + $0x30] sm:$0xff] %v2159
  %2168 = vst [vmem:[%s10 + $0x38] sm:$0xff] %v2160
  // Predicated region
  $region42: #{pallas_forward.1} parent=0 // pred_check
    _
  $region43: #{pallas_forward.1} parent=0 // pred_check_branch
    %2170 = sbr.rel (0) target = $region45
  $region44: #{pallas_forward.1} parent=0 // pred_region
    _
  $region45: #{pallas_forward.1} parent=0 // pred_fallthru
    _
  // Predicated region
  $region46: #{pallas_forward.1} parent=0 // pred_check
    _
  $region47: #{pallas_forward.1} parent=0 // pred_check_branch
    %2172 = sbr.rel (0) target = $region49
  $region48: #{pallas_forward.1} parent=0 // pred_region
    _
  $region49: #{pallas_forward.1} parent=0 // pred_fallthru
    _
  // Predicated region
  $region50: #{pallas_forward.1} parent=0 // pred_check
    _
  $region51: #{pallas_forward.1} parent=0 // pred_check_branch
    %2174 = sbr.rel (0) target = $region53
  $region52: #{pallas_forward.1} parent=0 // pred_region
    _
  $region53: #{pallas_forward.1} parent=0 // pred_fallthru
    _
  // Predicated region
  $region54: #{pallas_forward.1} parent=0 // pred_check
    _
  $region55: #{pallas_forward.1} parent=0 // pred_check_branch
    %2176 = sbr.rel (0) target = $region57
  $region56: #{pallas_forward.1} parent=0 // pred_region
    _
  $region57: #{pallas_forward.1} parent=0 // pred_fallthru
    _

</llo_original>
